<compile_context>
chip_gen: v7x
topology: tpu7x:2x2x1
jax: 0.10.0
libtpu: 0.0.40
codegen_flags: <defaults>
</compile_context>

<pallas_src>
import functools

import jax
import jax.numpy as jnp
from jax.experimental import pallas as pl
from jax.experimental.pallas import tpu as pltpu

EPS = 1e-3  # BatchNorm1d eps=0.001


# ----------------------------- in-kernel helpers ----------------------------

def _fill_slab(slab_ref, xl_ref, xc_ref, xr_ref, *, pad, hb):
    """Assemble the zero-padded (TL + 2*pad, Cin) slab in VMEM.

    xl_ref/xr_ref are 8-row halo blocks of the previous / next sequence tile;
    they are masked to zero at the sequence boundaries (same padding).
    """
    tl = xc_ref.shape[1]
    slab_ref[pad:pad + tl, :] = xc_ref[0]
    if pad > 0:
        j = pl.program_id(1)
        last = pl.num_programs(1) - 1
        left = jnp.where(j > 0, xl_ref[0, hb - pad:, :], 0.0)
        right = jnp.where(j < last, xr_ref[0, :pad, :], 0.0)
        slab_ref[:pad, :] = left.astype(slab_ref.dtype)
        slab_ref[pad + tl:, :] = right.astype(slab_ref.dtype)


def _conv_bn_from_slab(slab_ref, w_ref, scale_ref, shift_ref, *, k_taps, tl,
                       mm_dtype):
    """K-tap conv (as K skinny matmuls) + folded-BN affine. f32 accumulation."""
    cout = w_ref.shape[-1]
    acc = jnp.zeros((tl, cout), dtype=jnp.float32)
    for k in range(k_taps):  # K is small (<= 11); static unrolled taps
        a = slab_ref[k:k + tl, :]
        wk = w_ref[k]
        if mm_dtype is not None:
            a = a.astype(mm_dtype)
            wk = wk.astype(mm_dtype)
        acc = acc + jnp.dot(a, wk, preferred_element_type=jnp.float32)
    return acc * scale_ref[...] + shift_ref[...]


def _residual_1x1(xc_ref, wr_ref, sr_ref, tr_ref, *, mm_dtype):
    a = xc_ref[0]
    w = wr_ref[...]
    if mm_dtype is not None:
        a = a.astype(mm_dtype)
        w = w.astype(mm_dtype)
    r = jnp.dot(a, w, preferred_element_type=jnp.float32)
    return r * sr_ref[...] + tr_ref[...]


# ------------------------------ Pallas kernels -------------------------------

def _first_layer_kernel(xl, xc, xr, w, s, t, wr, sr, tr, h_out, res_out, slab,
                        *, k_taps, pad, hb, mm_dtype):
    """conv+BN+ReLU of repeat-0 AND the fused 1x1 residual conv+BN."""
    tl = h_out.shape[1]
    _fill_slab(slab, xl, xc, xr, pad=pad, hb=hb)
    y = _conv_bn_from_slab(slab, w, s, t, k_taps=k_taps, tl=tl,
                           mm_dtype=mm_dtype)
    h_out[0] = jnp.maximum(y, 0.0).astype(h_out.dtype)
    res_out[0] = _residual_1x1(xc, wr, sr, tr,
                               mm_dtype=mm_dtype).astype(res_out.dtype)


def _mid_layer_kernel(xl, xc, xr, w, s, t, o, slab, *, k_taps, pad, hb,
                      mm_dtype):
    tl = o.shape[1]
    _fill_slab(slab, xl, xc, xr, pad=pad, hb=hb)
    y = _conv_bn_from_slab(slab, w, s, t, k_taps=k_taps, tl=tl,
                           mm_dtype=mm_dtype)
    o[0] = jnp.maximum(y, 0.0).astype(o.dtype)


def _last_layer_kernel(xl, xc, xr, w, s, t, res, o, slab, *, k_taps, pad, hb,
                       mm_dtype):
    """Last repeat: conv+BN+ReLU fused with `+ residual` and final ReLU."""
    tl = o.shape[1]
    _fill_slab(slab, xl, xc, xr, pad=pad, hb=hb)
    y = _conv_bn_from_slab(slab, w, s, t, k_taps=k_taps, tl=tl,
                           mm_dtype=mm_dtype)
    y = jnp.maximum(y, 0.0)  # layer ReLU
    o[0] = jnp.maximum(y + res[0].astype(jnp.float32), 0.0).astype(o.dtype)


def _single_layer_kernel(xl, xc, xr, w, s, t, wr, sr, tr, o, slab, *, k_taps,
                         pad, hb, mm_dtype):
    """repeat == 1: everything fused into one kernel."""
    tl = o.shape[1]
    _fill_slab(slab, xl, xc, xr, pad=pad, hb=hb)
    y = _conv_bn_from_slab(slab, w, s, t, k_taps=k_taps, tl=tl,
                           mm_dtype=mm_dtype)
    h = jnp.maximum(y, 0.0)
    r = _residual_1x1(xc, wr, sr, tr, mm_dtype=mm_dtype)
    o[0] = jnp.maximum(h + r, 0.0).astype(o.dtype)


_KERNELS = {
    "first": _first_layer_kernel,
    "mid": _mid_layer_kernel,
    "last": _last_layer_kernel,
    "single": _single_layer_kernel,
}


# ------------------------------ layer wrapper --------------------------------

def _conv_layer(mode, x, w_kic, scale, shift, *, pad, hb, tl, mm_dtype,
                res=None, wr_ic=None, scale_r=None, shift_r=None):
    """One fused conv layer. x: (N, L, Cin) channels-last."""
    n, L, cin = x.shape
    k_taps, _, cout = w_kic.shape
    ntiles = L // tl
    th = max(tl // hb, 0)          # halo blocks per sequence tile
    nhb = max(L // hb, 1)          # number of halo blocks along L

    def lmap(b, j):                # previous tile's trailing halo block
        return (b, jnp.maximum(j * th - 1, 0), 0)

    def cmap(b, j):                # current tile
        return (b, j, 0)

    def rmap(b, j):                # next tile's leading halo block
        return (b, jnp.minimum((j + 1) * th, nhb - 1), 0)

    def bmap(b, j):                # broadcast (weights / BN params)
        return (0, 0)

    def wmap(b, j):
        return (0, 0, 0)

    in_specs = [
        pl.BlockSpec((1, hb, cin), lmap),
        pl.BlockSpec((1, tl, cin), cmap),
        pl.BlockSpec((1, hb, cin), rmap),
        pl.BlockSpec((k_taps, cin, cout), wmap),
        pl.BlockSpec((1, cout), bmap),
        pl.BlockSpec((1, cout), bmap),
    ]
    inputs = [x, x, x, w_kic, scale, shift]

    if mode == "last":
        in_specs.append(pl.BlockSpec((1, tl, cout), cmap))
        inputs.append(res)
    if mode in ("first", "single"):
        in_specs += [
            pl.BlockSpec((cin, cout), bmap),
            pl.BlockSpec((1, cout), bmap),
            pl.BlockSpec((1, cout), bmap),
        ]
        inputs += [wr_ic, scale_r, shift_r]

    o_sds = jax.ShapeDtypeStruct((n, L, cout), x.dtype)
    if mode == "first":
        out_shape = (o_sds, o_sds)
        out_specs = (pl.BlockSpec((1, tl, cout), cmap),
                     pl.BlockSpec((1, tl, cout), cmap))
    else:
        out_shape = o_sds
        out_specs = pl.BlockSpec((1, tl, cout), cmap)

    kernel = functools.partial(_KERNELS[mode], k_taps=k_taps, pad=pad, hb=hb,
                               mm_dtype=mm_dtype)

    return pl.pallas_call(
        kernel,
        grid=(n, ntiles),
        in_specs=in_specs,
        out_specs=out_specs,
        out_shape=out_shape,
        scratch_shapes=[pltpu.VMEM((tl + 2 * pad, cin), x.dtype)],
        compiler_params=pltpu.CompilerParams(
            dimension_semantics=("parallel", "parallel"),
            vmem_limit_bytes=32 * 1024 * 1024),
    )(*inputs)


# ------------------------------ block wrapper --------------------------------

def _fold_bn(gamma, beta, mean, var):
    scale = gamma / jnp.sqrt(var + EPS)
    shift = beta - mean * scale
    return scale, shift


def _default_seq_tile(L):
    if L <= 512:                 # whole sequence fits one tile comfortably
        return L
    for t in (512, 384, 256, 128, 64, 32, 16, 8):   # v7x-safe cap at 512 rows
        if L % t == 0:
            return t
    return L


def main_block_forward(x_ncl, params, *, repeat=3, kernel_size=11,
                       seq_tile=None, matmul_dtype=None):
    """MainBlock forward. x_ncl: (N, C_in, L) (PyTorch layout) -> (N, C_out, L)."""
    assert repeat >= 1
    pad = (kernel_size - 1) // 2                    # same-padding, stride=1
    hb = 8 * max(1, (pad + 7) // 8)                 # halo block rows (>= pad, 8-aligned)

    x_nlc = jnp.transpose(x_ncl, (0, 2, 1))         # -> (N, L, C)
    _, L, _ = x_nlc.shape

    tl = seq_tile if seq_tile is not None else _default_seq_tile(L)
    if (L % tl != 0) or (tl != L and tl % 8 != 0) or (L // tl > 1 and tl % hb != 0):
        tl = L                                      # safe fallback: one tile

    def fold(i):
        w = jnp.transpose(params[f"w{i}"], (2, 1, 0))   # (K, Cin, Cout)
        if matmul_dtype is not None:
            w = w.astype(matmul_dtype)
        s, t = _fold_bn(params[f"bn{i}_g"], params[f"bn{i}_b"],
                        params[f"bn{i}_m"], params[f"bn{i}_v"])
        return w, s.reshape(1, -1), t.reshape(1, -1)

    wr = jnp.transpose(params["wr"], (2, 1, 0))[0]      # (Cin, Cout)
    if matmul_dtype is not None:
        wr = wr.astype(matmul_dtype)
    sr, tr = _fold_bn(params["bnr_g"], params["bnr_b"],
                      params["bnr_m"], params["bnr_v"])
    sr, tr = sr.reshape(1, -1), tr.reshape(1, -1)

    common = dict(pad=pad, hb=hb, tl=tl, mm_dtype=matmul_dtype)

    if repeat == 1:
        w0, s0, t0 = fold(0)
        out = _conv_layer("single", x_nlc, w0, s0, t0,
                          wr_ic=wr, scale_r=sr, shift_r=tr, **common)
    else:
        w0, s0, t0 = fold(0)
        h, res = _conv_layer("first", x_nlc, w0, s0, t0,
                             wr_ic=wr, scale_r=sr, shift_r=tr, **common)
        for i in range(1, repeat - 1):
            wi, si, ti = fold(i)
            h = _conv_layer("mid", h, wi, si, ti, **common)
        wl, sl, tl_shift = fold(repeat - 1)
        out = _conv_layer("last", h, wl, sl, tl_shift, res=res, **common)

    return jnp.transpose(out, (0, 2, 1))                # -> (N, C_out, L)


# ------------------------- Pure-JAX reference -------------------------------

def _ref_forward(x_ncl, params, *, repeat=3, kernel_size=11):
    pad = (kernel_size - 1) // 2

    def conv(x, w, p):
        return jax.lax.conv_general_dilated(
            x, w, window_strides=(1,), padding=[(p, p)],
            dimension_numbers=("NCH", "OIH", "NCH"))

    def bn(x, g, b, m, v):
        return ((x - m[None, :, None]) / jnp.sqrt(v[None, :, None] + EPS)
                * g[None, :, None] + b[None, :, None])

    h = x_ncl
    for i in range(repeat):
        h = jnp.maximum(
            bn(conv(h, params[f"w{i}"], pad),
               params[f"bn{i}_g"], params[f"bn{i}_b"],
               params[f"bn{i}_m"], params[f"bn{i}_v"]), 0.0)
    res = bn(conv(x_ncl, params["wr"], 0),
             params["bnr_g"], params["bnr_b"], params["bnr_m"], params["bnr_v"])
    return jnp.maximum(h + res, 0.0)


# --------------------------------- main --------------------------------------

if __name__ == "__main__":
    N, C_IN, L = 2, 4, 32
    PLANES, REPEAT, K = 8, 3, 11
    SEQ_TILE = 16   # 2 sequence tiles -> exercises the halo / tiling path

    key = jax.random.PRNGKey(0)
    keys = iter(jax.random.split(key, 32))

    params = {}
    cin = C_IN
    for i in range(REPEAT):
        params[f"w{i}"] = 0.1 * jax.random.normal(next(keys), (PLANES, cin, K),
                                                  dtype=jnp.float32)
        params[f"bn{i}_g"] = jax.random.uniform(next(keys), (PLANES,), minval=0.5,
                                                maxval=1.5, dtype=jnp.float32)
        params[f"bn{i}_b"] = 0.1 * jax.random.normal(next(keys), (PLANES,),
                                                     dtype=jnp.float32)
        params[f"bn{i}_m"] = 0.1 * jax.random.normal(next(keys), (PLANES,),
                                                     dtype=jnp.float32)
        params[f"bn{i}_v"] = jax.random.uniform(next(keys), (PLANES,), minval=0.5,
                                                maxval=1.5, dtype=jnp.float32)
        cin = PLANES

    params["wr"] = 0.1 * jax.random.normal(next(keys), (PLANES, C_IN, 1),
                                           dtype=jnp.float32)
    params["bnr_g"] = jax.random.uniform(next(keys), (PLANES,), minval=0.5,
                                         maxval=1.5, dtype=jnp.float32)
    params["bnr_b"] = 0.1 * jax.random.normal(next(keys), (PLANES,),
                                              dtype=jnp.float32)
    params["bnr_m"] = 0.1 * jax.random.normal(next(keys), (PLANES,),
                                              dtype=jnp.float32)
    params["bnr_v"] = jax.random.uniform(next(keys), (PLANES,), minval=0.5,
                                         maxval=1.5, dtype=jnp.float32)

    x = jax.random.normal(next(keys), (N, C_IN, L), dtype=jnp.float32)

    out = main_block_forward(x, params, repeat=REPEAT, kernel_size=K,
                             seq_tile=SEQ_TILE)
    out = jax.block_until_ready(out)

    ref = _ref_forward(x, params, repeat=REPEAT, kernel_size=K)
    assert out.shape == (N, PLANES, L), out.shape
    assert jnp.allclose(out, ref, rtol=1e-5, atol=1e-5), \
        f"max abs err {jnp.max(jnp.abs(out - ref))}"

    print("KERNEL_OK")
</pallas_src>

<mosaic_0001>
module attributes {stable_mosaic.version = 11 : i64} {
  func.func @_first_layer_kernel(%arg0: i32, %arg1: i32, %arg2: memref<1x8x4xf32, #tpu.memory_space<vmem>>, %arg3: memref<1x16x4xf32, #tpu.memory_space<vmem>>, %arg4: memref<1x8x4xf32, #tpu.memory_space<vmem>>, %arg5: memref<11x4x8xf32, #tpu.memory_space<vmem>>, %arg6: memref<1x8xf32, #tpu.memory_space<vmem>>, %arg7: memref<1x8xf32, #tpu.memory_space<vmem>>, %arg8: memref<4x8xf32, #tpu.memory_space<vmem>>, %arg9: memref<1x8xf32, #tpu.memory_space<vmem>>, %arg10: memref<1x8xf32, #tpu.memory_space<vmem>>, %arg11: memref<1x16x8xf32, #tpu.memory_space<vmem>>, %arg12: memref<1x16x8xf32, #tpu.memory_space<vmem>>, %arg13: memref<26x4xf32, #tpu.memory_space<vmem>>) attributes {dimension_semantics = [#tpu.dimension_semantics<parallel>, #tpu.dimension_semantics<parallel>], iteration_bounds = array<i64: 2, 2>, scalar_prefetch = 0 : i64, scratch_operands = 1 : i64, tpu.core_type = #tpu.core_type<tc>, window_params = [{transform_indices = @transform_0, window_bounds = array<i64: 1, 8, 4>}, {transform_indices = @transform_1, window_bounds = array<i64: 1, 16, 4>}, {transform_indices = @transform_2, window_bounds = array<i64: 1, 8, 4>}, {pipeline_mode = #tpu.pipeline_mode<synchronous>, transform_indices = @transform_3, window_bounds = array<i64: 11, 4, 8>}, {pipeline_mode = #tpu.pipeline_mode<synchronous>, transform_indices = @transform_4, window_bounds = array<i64: 1, 8>}, {pipeline_mode = #tpu.pipeline_mode<synchronous>, transform_indices = @transform_5, window_bounds = array<i64: 1, 8>}, {pipeline_mode = #tpu.pipeline_mode<synchronous>, transform_indices = @transform_6, window_bounds = array<i64: 4, 8>}, {pipeline_mode = #tpu.pipeline_mode<synchronous>, transform_indices = @transform_7, window_bounds = array<i64: 1, 8>}, {pipeline_mode = #tpu.pipeline_mode<synchronous>, transform_indices = @transform_8, window_bounds = array<i64: 1, 8>}, {transform_indices = @transform_9, window_bounds = array<i64: 1, 16, 8>}, {transform_indices = @transform_10, window_bounds = array<i64: 1, 16, 8>}]} {
    %c0 = arith.constant 0 : index
    %c0_0 = arith.constant 0 : index
    %c0_1 = arith.constant 0 : index
    %0 = vector.load %arg3[%c0, %c0_0, %c0_1] : memref<1x16x4xf32, #tpu.memory_space<vmem>>, vector<1x16x4xf32>
    %1 = vector.shape_cast %0 : vector<1x16x4xf32> to vector<16x4xf32>
    %c5 = arith.constant 5 : index
    %c0_2 = arith.constant 0 : index
    %2 = vector.load %arg13[%c5, %c0_2] : memref<26x4xf32, #tpu.memory_space<vmem>>, vector<16x4xf32>
    tpu.vector_store %arg13[%c5, %c0_2], %1 {strides = array<i32>} : memref<26x4xf32, #tpu.memory_space<vmem>>, vector<16x4xf32>,
    %c0_i32 = arith.constant 0 : i32
    %3 = arith.cmpi sgt, %arg1, %c0_i32 : i32
    %c0_3 = arith.constant 0 : index
    %c3 = arith.constant 3 : index
    %c0_4 = arith.constant 0 : index
    %4 = vector.load %arg2[%c0_3, %c3, %c0_4] : memref<1x8x4xf32, #tpu.memory_space<vmem>>, vector<1x5x4xf32>
    %5 = vector.shape_cast %4 : vector<1x5x4xf32> to vector<5x4xf32>
    %cst = arith.constant 0.000000e+00 : f32
    %6 = vector.broadcast %cst : f32 to vector<5x4xf32>
    %7 = arith.select %3, %5, %6 : vector<5x4xf32>
    %c1_i32 = arith.constant 1 : i32
    %8 = arith.cmpi slt, %arg1, %c1_i32 : i32
    %c0_5 = arith.constant 0 : index
    %c0_6 = arith.constant 0 : index
    %c0_7 = arith.constant 0 : index
    %9 = vector.load %arg4[%c0_5, %c0_6, %c0_7] : memref<1x8x4xf32, #tpu.memory_space<vmem>>, vector<1x5x4xf32>
    %10 = vector.shape_cast %9 : vector<1x5x4xf32> to vector<5x4xf32>
    %cst_8 = arith.constant 0.000000e+00 : f32
    %11 = vector.broadcast %cst_8 : f32 to vector<5x4xf32>
    %12 = arith.select %8, %10, %11 : vector<5x4xf32>
    %c0_9 = arith.constant 0 : index
    %c0_10 = arith.constant 0 : index
    %13 = vector.load %arg13[%c0_9, %c0_10] : memref<26x4xf32, #tpu.memory_space<vmem>>, vector<5x4xf32>
    tpu.vector_store %arg13[%c0_9, %c0_10], %7 {strides = array<i32>} : memref<26x4xf32, #tpu.memory_space<vmem>>, vector<5x4xf32>,
    %c21 = arith.constant 21 : index
    %c0_11 = arith.constant 0 : index
    %14 = vector.load %arg13[%c21, %c0_11] : memref<26x4xf32, #tpu.memory_space<vmem>>, vector<5x4xf32>
    tpu.vector_store %arg13[%c21, %c0_11], %12 {strides = array<i32>} : memref<26x4xf32, #tpu.memory_space<vmem>>, vector<5x4xf32>,
    %cst_12 = arith.constant 0.000000e+00 : f32
    %15 = vector.broadcast %cst_12 : f32 to vector<16x8xf32>
    %c0_13 = arith.constant 0 : index
    %c0_14 = arith.constant 0 : index
    %16 = vector.load %arg13[%c0_13, %c0_14] : memref<26x4xf32, #tpu.memory_space<vmem>>, vector<16x4xf32>
    %c0_15 = arith.constant 0 : index
    %c0_16 = arith.constant 0 : index
    %c0_17 = arith.constant 0 : index
    %17 = vector.load %arg5[%c0_15, %c0_16, %c0_17] : memref<11x4x8xf32, #tpu.memory_space<vmem>>, vector<1x4x8xf32>
    %18 = vector.shape_cast %17 : vector<1x4x8xf32> to vector<4x8xf32>
    %cst_18 = arith.constant dense<0.000000e+00> : vector<16x8xf32>
    %19 = tpu.matmul %16, %18, %cst_18 {dimension_numbers = #tpu.dot_dimension_numbers<[1], [0], [0], [1], [0, 0, 1, 1], [], []>} : vector<16x4xf32>, vector<4x8xf32>, vector<16x8xf32> -> vector<16x8xf32>
    %20 = arith.addf %15, %19 : vector<16x8xf32>
    %c1 = arith.constant 1 : index
    %c0_19 = arith.constant 0 : index
    %21 = vector.load %arg13[%c1, %c0_19] : memref<26x4xf32, #tpu.memory_space<vmem>>, vector<16x4xf32>
    %c1_20 = arith.constant 1 : index
    %c0_21 = arith.constant 0 : index
    %c0_22 = arith.constant 0 : index
    %22 = vector.load %arg5[%c1_20, %c0_21, %c0_22] : memref<11x4x8xf32, #tpu.memory_space<vmem>>, vector<1x4x8xf32>
    %23 = vector.shape_cast %22 : vector<1x4x8xf32> to vector<4x8xf32>
    %cst_23 = arith.constant dense<0.000000e+00> : vector<16x8xf32>
    %24 = tpu.matmul %21, %23, %cst_23 {dimension_numbers = #tpu.dot_dimension_numbers<[1], [0], [0], [1], [0, 0, 1, 1], [], []>} : vector<16x4xf32>, vector<4x8xf32>, vector<16x8xf32> -> vector<16x8xf32>
    %25 = arith.addf %20, %24 : vector<16x8xf32>
    %c2 = arith.constant 2 : index
    %c0_24 = arith.constant 0 : index
    %26 = vector.load %arg13[%c2, %c0_24] : memref<26x4xf32, #tpu.memory_space<vmem>>, vector<16x4xf32>
    %c2_25 = arith.constant 2 : index
    %c0_26 = arith.constant 0 : index
    %c0_27 = arith.constant 0 : index
    %27 = vector.load %arg5[%c2_25, %c0_26, %c0_27] : memref<11x4x8xf32, #tpu.memory_space<vmem>>, vector<1x4x8xf32>
    %28 = vector.shape_cast %27 : vector<1x4x8xf32> to vector<4x8xf32>
    %cst_28 = arith.constant dense<0.000000e+00> : vector<16x8xf32>
    %29 = tpu.matmul %26, %28, %cst_28 {dimension_numbers = #tpu.dot_dimension_numbers<[1], [0], [0], [1], [0, 0, 1, 1], [], []>} : vector<16x4xf32>, vector<4x8xf32>, vector<16x8xf32> -> vector<16x8xf32>
    %30 = arith.addf %25, %29 : vector<16x8xf32>
    %c3_29 = arith.constant 3 : index
    %c0_30 = arith.constant 0 : index
    %31 = vector.load %arg13[%c3_29, %c0_30] : memref<26x4xf32, #tpu.memory_space<vmem>>, vector<16x4xf32>
    %c3_31 = arith.constant 3 : index
    %c0_32 = arith.constant 0 : index
    %c0_33 = arith.constant 0 : index
    %32 = vector.load %arg5[%c3_31, %c0_32, %c0_33] : memref<11x4x8xf32, #tpu.memory_space<vmem>>, vector<1x4x8xf32>
    %33 = vector.shape_cast %32 : vector<1x4x8xf32> to vector<4x8xf32>
    %cst_34 = arith.constant dense<0.000000e+00> : vector<16x8xf32>
    %34 = tpu.matmul %31, %33, %cst_34 {dimension_numbers = #tpu.dot_dimension_numbers<[1], [0], [0], [1], [0, 0, 1, 1], [], []>} : vector<16x4xf32>, vector<4x8xf32>, vector<16x8xf32> -> vector<16x8xf32>
    %35 = arith.addf %30, %34 : vector<16x8xf32>
    %c4 = arith.constant 4 : index
    %c0_35 = arith.constant 0 : index
    %36 = vector.load %arg13[%c4, %c0_35] : memref<26x4xf32, #tpu.memory_space<vmem>>, vector<16x4xf32>
    %c4_36 = arith.constant 4 : index
    %c0_37 = arith.constant 0 : index
    %c0_38 = arith.constant 0 : index
    %37 = vector.load %arg5[%c4_36, %c0_37, %c0_38] : memref<11x4x8xf32, #tpu.memory_space<vmem>>, vector<1x4x8xf32>
    %38 = vector.shape_cast %37 : vector<1x4x8xf32> to vector<4x8xf32>
    %cst_39 = arith.constant dense<0.000000e+00> : vector<16x8xf32>
    %39 = tpu.matmul %36, %38, %cst_39 {dimension_numbers = #tpu.dot_dimension_numbers<[1], [0], [0], [1], [0, 0, 1, 1], [], []>} : vector<16x4xf32>, vector<4x8xf32>, vector<16x8xf32> -> vector<16x8xf32>
    %40 = arith.addf %35, %39 : vector<16x8xf32>
    %c5_40 = arith.constant 5 : index
    %c0_41 = arith.constant 0 : index
    %41 = vector.load %arg13[%c5_40, %c0_41] : memref<26x4xf32, #tpu.memory_space<vmem>>, vector<16x4xf32>
    %c5_42 = arith.constant 5 : index
    %c0_43 = arith.constant 0 : index
    %c0_44 = arith.constant 0 : index
    %42 = vector.load %arg5[%c5_42, %c0_43, %c0_44] : memref<11x4x8xf32, #tpu.memory_space<vmem>>, vector<1x4x8xf32>
    %43 = vector.shape_cast %42 : vector<1x4x8xf32> to vector<4x8xf32>
    %cst_45 = arith.constant dense<0.000000e+00> : vector<16x8xf32>
    %44 = tpu.matmul %41, %43, %cst_45 {dimension_numbers = #tpu.dot_dimension_numbers<[1], [0], [0], [1], [0, 0, 1, 1], [], []>} : vector<16x4xf32>, vector<4x8xf32>, vector<16x8xf32> -> vector<16x8xf32>
    %45 = arith.addf %40, %44 : vector<16x8xf32>
    %c6 = arith.constant 6 : index
    %c0_46 = arith.constant 0 : index
    %46 = vector.load %arg13[%c6, %c0_46] : memref<26x4xf32, #tpu.memory_space<vmem>>, vector<16x4xf32>
    %c6_47 = arith.constant 6 : index
    %c0_48 = arith.constant 0 : index
    %c0_49 = arith.constant 0 : index
    %47 = vector.load %arg5[%c6_47, %c0_48, %c0_49] : memref<11x4x8xf32, #tpu.memory_space<vmem>>, vector<1x4x8xf32>
    %48 = vector.shape_cast %47 : vector<1x4x8xf32> to vector<4x8xf32>
    %cst_50 = arith.constant dense<0.000000e+00> : vector<16x8xf32>
    %49 = tpu.matmul %46, %48, %cst_50 {dimension_numbers = #tpu.dot_dimension_numbers<[1], [0], [0], [1], [0, 0, 1, 1], [], []>} : vector<16x4xf32>, vector<4x8xf32>, vector<16x8xf32> -> vector<16x8xf32>
    %50 = arith.addf %45, %49 : vector<16x8xf32>
    %c7 = arith.constant 7 : index
    %c0_51 = arith.constant 0 : index
    %51 = vector.load %arg13[%c7, %c0_51] : memref<26x4xf32, #tpu.memory_space<vmem>>, vector<16x4xf32>
    %c7_52 = arith.constant 7 : index
    %c0_53 = arith.constant 0 : index
    %c0_54 = arith.constant 0 : index
    %52 = vector.load %arg5[%c7_52, %c0_53, %c0_54] : memref<11x4x8xf32, #tpu.memory_space<vmem>>, vector<1x4x8xf32>
    %53 = vector.shape_cast %52 : vector<1x4x8xf32> to vector<4x8xf32>
    %cst_55 = arith.constant dense<0.000000e+00> : vector<16x8xf32>
    %54 = tpu.matmul %51, %53, %cst_55 {dimension_numbers = #tpu.dot_dimension_numbers<[1], [0], [0], [1], [0, 0, 1, 1], [], []>} : vector<16x4xf32>, vector<4x8xf32>, vector<16x8xf32> -> vector<16x8xf32>
    %55 = arith.addf %50, %54 : vector<16x8xf32>
    %c8 = arith.constant 8 : index
    %c0_56 = arith.constant 0 : index
    %56 = vector.load %arg13[%c8, %c0_56] : memref<26x4xf32, #tpu.memory_space<vmem>>, vector<16x4xf32>
    %c8_57 = arith.constant 8 : index
    %c0_58 = arith.constant 0 : index
    %c0_59 = arith.constant 0 : index
    %57 = vector.load %arg5[%c8_57, %c0_58, %c0_59] : memref<11x4x8xf32, #tpu.memory_space<vmem>>, vector<1x4x8xf32>
    %58 = vector.shape_cast %57 : vector<1x4x8xf32> to vector<4x8xf32>
    %cst_60 = arith.constant dense<0.000000e+00> : vector<16x8xf32>
    %59 = tpu.matmul %56, %58, %cst_60 {dimension_numbers = #tpu.dot_dimension_numbers<[1], [0], [0], [1], [0, 0, 1, 1], [], []>} : vector<16x4xf32>, vector<4x8xf32>, vector<16x8xf32> -> vector<16x8xf32>
    %60 = arith.addf %55, %59 : vector<16x8xf32>
    %c9 = arith.constant 9 : index
    %c0_61 = arith.constant 0 : index
    %61 = vector.load %arg13[%c9, %c0_61] : memref<26x4xf32, #tpu.memory_space<vmem>>, vector<16x4xf32>
    %c9_62 = arith.constant 9 : index
    %c0_63 = arith.constant 0 : index
    %c0_64 = arith.constant 0 : index
    %62 = vector.load %arg5[%c9_62, %c0_63, %c0_64] : memref<11x4x8xf32, #tpu.memory_space<vmem>>, vector<1x4x8xf32>
    %63 = vector.shape_cast %62 : vector<1x4x8xf32> to vector<4x8xf32>
    %cst_65 = arith.constant dense<0.000000e+00> : vector<16x8xf32>
    %64 = tpu.matmul %61, %63, %cst_65 {dimension_numbers = #tpu.dot_dimension_numbers<[1], [0], [0], [1], [0, 0, 1, 1], [], []>} : vector<16x4xf32>, vector<4x8xf32>, vector<16x8xf32> -> vector<16x8xf32>
    %65 = arith.addf %60, %64 : vector<16x8xf32>
    %c10 = arith.constant 10 : index
    %c0_66 = arith.constant 0 : index
    %66 = vector.load %arg13[%c10, %c0_66] : memref<26x4xf32, #tpu.memory_space<vmem>>, vector<16x4xf32>
    %c10_67 = arith.constant 10 : index
    %c0_68 = arith.constant 0 : index
    %c0_69 = arith.constant 0 : index
    %67 = vector.load %arg5[%c10_67, %c0_68, %c0_69] : memref<11x4x8xf32, #tpu.memory_space<vmem>>, vector<1x4x8xf32>
    %68 = vector.shape_cast %67 : vector<1x4x8xf32> to vector<4x8xf32>
    %cst_70 = arith.constant dense<0.000000e+00> : vector<16x8xf32>
    %69 = tpu.matmul %66, %68, %cst_70 {dimension_numbers = #tpu.dot_dimension_numbers<[1], [0], [0], [1], [0, 0, 1, 1], [], []>} : vector<16x4xf32>, vector<4x8xf32>, vector<16x8xf32> -> vector<16x8xf32>
    %70 = arith.addf %65, %69 : vector<16x8xf32>
    %c0_71 = arith.constant 0 : index
    %c0_72 = arith.constant 0 : index
    %71 = vector.load %arg6[%c0_71, %c0_72] : memref<1x8xf32, #tpu.memory_space<vmem>>, vector<1x8xf32>
    %72 = vector.broadcast %71 : vector<1x8xf32> to vector<16x8xf32>
    %73 = arith.mulf %70, %72 : vector<16x8xf32>
    %c0_73 = arith.constant 0 : index
    %c0_74 = arith.constant 0 : index
    %74 = vector.load %arg7[%c0_73, %c0_74] : memref<1x8xf32, #tpu.memory_space<vmem>>, vector<1x8xf32>
    %75 = vector.broadcast %74 : vector<1x8xf32> to vector<16x8xf32>
    %76 = arith.addf %73, %75 : vector<16x8xf32>
    %cst_75 = arith.constant 0.000000e+00 : f32
    %77 = vector.broadcast %cst_75 : f32 to vector<16x8xf32>
    %78 = arith.maximumf %76, %77 : vector<16x8xf32>
    %c0_76 = arith.constant 0 : index
    %c0_77 = arith.constant 0 : index
    %c0_78 = arith.constant 0 : index
    %79 = vector.load %arg11[%c0_76, %c0_77, %c0_78] : memref<1x16x8xf32, #tpu.memory_space<vmem>>, vector<1x16x8xf32>
    %80 = vector.shape_cast %79 : vector<1x16x8xf32> to vector<16x8xf32>
    %81 = vector.shape_cast %78 : vector<16x8xf32> to vector<1x16x8xf32>
    tpu.vector_store %arg11[%c0_76, %c0_77, %c0_78], %81 {strides = array<i32>} : memref<1x16x8xf32, #tpu.memory_space<vmem>>, vector<1x16x8xf32>,
    %c0_79 = arith.constant 0 : index
    %c0_80 = arith.constant 0 : index
    %c0_81 = arith.constant 0 : index
    %82 = vector.load %arg3[%c0_79, %c0_80, %c0_81] : memref<1x16x4xf32, #tpu.memory_space<vmem>>, vector<1x16x4xf32>
    %83 = vector.shape_cast %82 : vector<1x16x4xf32> to vector<16x4xf32>
    %c0_82 = arith.constant 0 : index
    %c0_83 = arith.constant 0 : index
    %84 = vector.load %arg8[%c0_82, %c0_83] : memref<4x8xf32, #tpu.memory_space<vmem>>, vector<4x8xf32>
    %cst_84 = arith.constant dense<0.000000e+00> : vector<16x8xf32>
    %85 = tpu.matmul %83, %84, %cst_84 {dimension_numbers = #tpu.dot_dimension_numbers<[1], [0], [0], [1], [0, 0, 1, 1], [], []>} : vector<16x4xf32>, vector<4x8xf32>, vector<16x8xf32> -> vector<16x8xf32>
    %c0_85 = arith.constant 0 : index
    %c0_86 = arith.constant 0 : index
    %86 = vector.load %arg9[%c0_85, %c0_86] : memref<1x8xf32, #tpu.memory_space<vmem>>, vector<1x8xf32>
    %87 = vector.broadcast %86 : vector<1x8xf32> to vector<16x8xf32>
    %88 = arith.mulf %85, %87 : vector<16x8xf32>
    %c0_87 = arith.constant 0 : index
    %c0_88 = arith.constant 0 : index
    %89 = vector.load %arg10[%c0_87, %c0_88] : memref<1x8xf32, #tpu.memory_space<vmem>>, vector<1x8xf32>
    %90 = vector.broadcast %89 : vector<1x8xf32> to vector<16x8xf32>
    %91 = arith.addf %88, %90 : vector<16x8xf32>
    %c0_89 = arith.constant 0 : index
    %c0_90 = arith.constant 0 : index
    %c0_91 = arith.constant 0 : index
    %92 = vector.load %arg12[%c0_89, %c0_90, %c0_91] : memref<1x16x8xf32, #tpu.memory_space<vmem>>, vector<1x16x8xf32>
    %93 = vector.shape_cast %92 : vector<1x16x8xf32> to vector<16x8xf32>
    %94 = vector.shape_cast %91 : vector<16x8xf32> to vector<1x16x8xf32>
    tpu.vector_store %arg12[%c0_89, %c0_90, %c0_91], %94 {strides = array<i32>} : memref<1x16x8xf32, #tpu.memory_space<vmem>>, vector<1x16x8xf32>,
    return
  }
  func.func @transform_0(%arg0: i32, %arg1: i32) -> (i32, i32, i32) {
    %c2_i32 = arith.constant 2 : i32
    %0 = arith.muli %arg1, %c2_i32 : i32
    %c1_i32 = arith.constant 1 : i32
    %1 = arith.subi %0, %c1_i32 : i32
    %c0_i32 = arith.constant 0 : i32
    %2 = arith.maxsi %1, %c0_i32 : i32
    %c0_i32_0 = arith.constant 0 : i32
    %c0_i32_1 = arith.constant 0 : i32
    return %arg0, %2, %c0_i32_0 : i32, i32, i32
  }
  func.func @transform_1(%arg0: i32, %arg1: i32) -> (i32, i32, i32) {
    %c0_i32 = arith.constant 0 : i32
    %c0_i32_0 = arith.constant 0 : i32
    return %arg0, %arg1, %c0_i32 : i32, i32, i32
  }
  func.func @transform_2(%arg0: i32, %arg1: i32) -> (i32, i32, i32) {
    %c1_i32 = arith.constant 1 : i32
    %0 = arith.addi %arg1, %c1_i32 : i32
    %c2_i32 = arith.constant 2 : i32
    %1 = arith.muli %0, %c2_i32 : i32
    %c3_i32 = arith.constant 3 : i32
    %2 = arith.minsi %1, %c3_i32 : i32
    %c0_i32 = arith.constant 0 : i32
    %c0_i32_0 = arith.constant 0 : i32
    return %arg0, %2, %c0_i32 : i32, i32, i32
  }
  func.func @transform_3(%arg0: i32, %arg1: i32) -> (i32, i32, i32) {
    %c0_i32 = arith.constant 0 : i32
    %c0_i32_0 = arith.constant 0 : i32
    %c0_i32_1 = arith.constant 0 : i32
    %c0_i32_2 = arith.constant 0 : i32
    return %c0_i32, %c0_i32_0, %c0_i32_1 : i32, i32, i32
  }
  func.func @transform_4(%arg0: i32, %arg1: i32) -> (i32, i32) {
    %c0_i32 = arith.constant 0 : i32
    %c0_i32_0 = arith.constant 0 : i32
    %c0_i32_1 = arith.constant 0 : i32
    return %c0_i32, %c0_i32_0 : i32, i32
  }
  func.func @transform_5(%arg0: i32, %arg1: i32) -> (i32, i32) {
    %c0_i32 = arith.constant 0 : i32
    %c0_i32_0 = arith.constant 0 : i32
    %c0_i32_1 = arith.constant 0 : i32
    return %c0_i32, %c0_i32_0 : i32, i32
  }
  func.func @transform_6(%arg0: i32, %arg1: i32) -> (i32, i32) {
    %c0_i32 = arith.constant 0 : i32
    %c0_i32_0 = arith.constant 0 : i32
    %c0_i32_1 = arith.constant 0 : i32
    return %c0_i32, %c0_i32_0 : i32, i32
  }
  func.func @transform_7(%arg0: i32, %arg1: i32) -> (i32, i32) {
    %c0_i32 = arith.constant 0 : i32
    %c0_i32_0 = arith.constant 0 : i32
    %c0_i32_1 = arith.constant 0 : i32
    return %c0_i32, %c0_i32_0 : i32, i32
  }
  func.func @transform_8(%arg0: i32, %arg1: i32) -> (i32, i32) {
    %c0_i32 = arith.constant 0 : i32
    %c0_i32_0 = arith.constant 0 : i32
    %c0_i32_1 = arith.constant 0 : i32
    return %c0_i32, %c0_i32_0 : i32, i32
  }
  func.func @transform_9(%arg0: i32, %arg1: i32) -> (i32, i32, i32) {
    %c0_i32 = arith.constant 0 : i32
    %c0_i32_0 = arith.constant 0 : i32
    return %arg0, %arg1, %c0_i32 : i32, i32, i32
  }
  func.func @transform_10(%arg0: i32, %arg1: i32) -> (i32, i32, i32) {
    %c0_i32 = arith.constant 0 : i32
    %c0_i32_0 = arith.constant 0 : i32
    return %arg0, %arg1, %c0_i32 : i32, i32, i32
  }
}

</mosaic_0001>

<llo_original>
// kernel: tpu_custom_call.1
$region0: #{tpu_custom_call.1}
  #allocation0 [shape = 'u32[]', space=smem, size = 0x4, offset = 0x4, fixed_abs, tag = 'smem constant byte address 0x4 - core index']
  #allocation1 [shape = 'u32[144,128]{1,0:T(1,128)}', space=vmem, size = 0x12000, scoped, tag = 'internal scratch']
  #allocation2 [shape = 'f32[26,4]{1,0:T(8,128)}', space=vmem, size = 0x4000, scoped, tag = 'scratch operand']
  %s0 = inlined_call_operand.vmem [shape: f32[2,32,4], index: 0, kind: input, shape index: {}]
  %s1 = inlined_call_operand.vmem [shape: f32[2,32,4], index: 1, kind: input, shape index: {}]
  %s2 = inlined_call_operand.vmem [shape: f32[2,32,4], index: 2, kind: input, shape index: {}]
  %s3 = inlined_call_operand.vmem [shape: f32[11,4,8], index: 3, kind: input, shape index: {}]
  %s4 = inlined_call_operand.vmem [shape: f32[1,8], index: 4, kind: input, shape index: {}]
  %s5 = inlined_call_operand.vmem [shape: f32[1,8], index: 5, kind: input, shape index: {}]
  %s6 = inlined_call_operand.vmem [shape: f32[4,8], index: 6, kind: input, shape index: {}]
  %s7 = inlined_call_operand.vmem [shape: f32[1,8], index: 7, kind: input, shape index: {}]
  %s8 = inlined_call_operand.vmem [shape: f32[1,8], index: 8, kind: input, shape index: {}]
  %s9 = inlined_call_operand.vmem [shape: f32[2,32,8], index: 9, kind: output, shape index: {0}]
  %s10 = inlined_call_operand.vmem [shape: f32[2,32,8], index: 10, kind: output, shape index: {1}]
  %11 = xla_tuple %s9, %s10
  %s12 = sld [smem:[#allocation0]]
  $region77: #{tpu_custom_call.1} parent=0
    _
  %s14 = ssub.s32 1, %s12
  %s15 = scalar_select 0, %s14, %s12
  loop: start=0, step=1, limit=6
  $region2: #{tpu_custom_call.1} parent=0 // loop_pre_header
    _
  $region3: #{tpu_custom_call.1} parent=0 // loop_header
    %s17 = sphi 0, %s21
    %p18 = scmp.ge.s32.totalorder %s17, 6
    %s24 = sphi 0, %s36
    %s25 = sphi 0, %s32
    %s26 = sphi 0, %s24
    %s27 = sphi 0, %s25
    %s28 = sphi 0, %s26
    %s29 = sphi 0, %s27
    %s49 = sphi 0, %s51
    %s52 = sphi 0, %s49
    %s53 = sphi 0, %s52
    %s69 = sphi 0, %s53
    %s77 = sphi 0, %s79
    %s80 = sphi 0, %s77
    %s81 = sphi 0, %s80
    %s97 = sphi 0, %s81
    %s113 = sphi 0, %s115
    %s116 = sphi 0, %s113
    %s117 = sphi 0, %s116
    %s133 = sphi 0, %s117
    %s137 = sphi 0, %s137
    %s139 = sphi 0, %s137
    %s140 = sphi 0, %s139
    %s154 = sphi 0, %s140
    %s158 = sphi 0, %s158
    %s160 = sphi 0, %s158
    %s161 = sphi 0, %s160
    %s175 = sphi 0, %s161
    %s179 = sphi 0, %s179
    %s181 = sphi 0, %s179
    %s182 = sphi 0, %s181
    %s196 = sphi 0, %s182
    %s200 = sphi 0, %s200
    %s202 = sphi 0, %s200
    %s203 = sphi 0, %s202
    %s217 = sphi 0, %s203
    %s221 = sphi 0, %s221
    %s223 = sphi 0, %s221
    %s224 = sphi 0, %s223
    %s238 = sphi 0, %s224
    %s242 = sphi 0, %s242
    %s244 = sphi 0, %s242
    %s245 = sphi 0, %s244
    %s259 = sphi 0, %s245
    %s267 = sphi 0, %s269
    %s270 = sphi 0, %s267
    %s271 = sphi 0, %s270
    %s287 = sphi 0, %s271
    %s295 = sphi 0, %s297
    %s298 = sphi 0, %s295
    %s299 = sphi 0, %s298
    %s315 = sphi 0, %s299
  $region4: #{tpu_custom_call.1} parent=0 // loop_header_branch
    %20 = sbr.rel (%p18) target = $region8
  $region5: #{tpu_custom_call.1} parent=0 // loop_body
    %s22 = ssub.s32 %s17, 1
    %s23 = ssub.s32 %s17, 2
    %s30 = sadd.s32 1, %s25
    %p31 = scmp.ge.s32.totalorder %s30, 2
    %s32 = scalar_select %p31, 0, %s30
    %s33 = sadd.s32 1, %s24
    %s34 = scalar_select %p31, %s33, %s24
    %p35 = scmp.ge.s32.totalorder %s34, 2
    %s36 = scalar_select %p35, 0, %s34
    %s37 = smul.u32 %s25, 2
    %s38 = ssub.s32 %s37, 1
    %p39 = scmp.gt.s32.totalorder %s38, 0
    %s40 = scalar_select %p39, %s38, 0
    %s41 = smul.u32 %s32, 2
    %s42 = ssub.s32 %s41, 1
    %p43 = scmp.gt.s32.totalorder %s42, 0
    %s44 = scalar_select %p43, %s42, 0
    %s45 = ssub.s32 %s24, %s36
    %s46 = ssub.s32 %s40, %s44
    %s47 = sor.u32 %s45, %s46
    %p48 = scmp.eq.s32.totalorder %s47, 0
    %s50 = sadd.s32 %s49, 1
    %s51 = scalar_select %p48, %s49, %s50
    %p54 = pneg %p48
    %p55 = scmp.eq.s32.totalorder %s17, 3
    %p56 = por %p54, %p55
    %p57 = scmp.ne.s32.totalorder %s49, %s52
    %p58 = scmp.eq.s32.totalorder %s17, 0
    %p59 = por %p57, %p58
    %p60 = scmp.ne.s32.totalorder %s49, %s52
    %p61 = scmp.eq.s32.totalorder %s22, 3
    %p62 = por %p60, %p61
    %p63 = scmp.ne.s32.totalorder %s52, %s53
    %p64 = scmp.eq.s32.totalorder %s22, 0
    %p65 = por %p63, %p64
    %p66 = scmp.ne.s32.totalorder %s52, %s53
    %p67 = scmp.eq.s32.totalorder %s23, 3
    %p68 = por %p66, %p67
    %p70 = scmp.ne.s32.totalorder %s53, %s69
    %p71 = scmp.eq.s32.totalorder %s23, 0
    %p72 = por %p70, %p71
    %s73 = ssub.s32 %s24, %s36
    %s74 = ssub.s32 %s25, %s32
    %s75 = sor.u32 %s73, %s74
    %p76 = scmp.eq.s32.totalorder %s75, 0
    %s78 = sadd.s32 %s77, 1
    %s79 = scalar_select %p76, %s77, %s78
    %p82 = pneg %p76
    %p83 = scmp.eq.s32.totalorder %s17, 3
    %p84 = por %p82, %p83
    %p85 = scmp.ne.s32.totalorder %s77, %s80
    %p86 = scmp.eq.s32.totalorder %s17, 0
    %p87 = por %p85, %p86
    %p88 = scmp.ne.s32.totalorder %s77, %s80
    %p89 = scmp.eq.s32.totalorder %s22, 3
    %p90 = por %p88, %p89
    %p91 = scmp.ne.s32.totalorder %s80, %s81
    %p92 = scmp.eq.s32.totalorder %s22, 0
    %p93 = por %p91, %p92
    %p94 = scmp.ne.s32.totalorder %s80, %s81
    %p95 = scmp.eq.s32.totalorder %s23, 3
    %p96 = por %p94, %p95
    %p98 = scmp.ne.s32.totalorder %s81, %s97
    %p99 = scmp.eq.s32.totalorder %s23, 0
    %p100 = por %p98, %p99
    %s101 = sadd.s32 %s25, 1
    %s102 = smul.u32 %s101, 2
    %p103 = scmp.lt.s32.totalorder %s102, 3
    %s104 = scalar_select %p103, %s102, 3
    %s105 = sadd.s32 %s32, 1
    %s106 = smul.u32 %s105, 2
    %p107 = scmp.lt.s32.totalorder %s106, 3
    %s108 = scalar_select %p107, %s106, 3
    %s109 = ssub.s32 %s24, %s36
    %s110 = ssub.s32 %s104, %s108
    %s111 = sor.u32 %s109, %s110
    %p112 = scmp.eq.s32.totalorder %s111, 0
    %s114 = sadd.s32 %s113, 1
    %s115 = scalar_select %p112, %s113, %s114
    %p118 = pneg %p112
    %p119 = scmp.eq.s32.totalorder %s17, 3
    %p120 = por %p118, %p119
    %p121 = scmp.ne.s32.totalorder %s113, %s116
    %p122 = scmp.eq.s32.totalorder %s17, 0
    %p123 = por %p121, %p122
    %p124 = scmp.ne.s32.totalorder %s113, %s116
    %p125 = scmp.eq.s32.totalorder %s22, 3
    %p126 = por %p124, %p125
    %p127 = scmp.ne.s32.totalorder %s116, %s117
    %p128 = scmp.eq.s32.totalorder %s22, 0
    %p129 = por %p127, %p128
    %p130 = scmp.ne.s32.totalorder %s116, %s117
    %p131 = scmp.eq.s32.totalorder %s23, 3
    %p132 = por %p130, %p131
    %p134 = scmp.ne.s32.totalorder %s117, %s133
    %p135 = scmp.eq.s32.totalorder %s23, 0
    %p136 = por %p134, %p135
    %s138 = sadd.s32 %s137, 1
    %p141 = scmp.eq.s32.totalorder %s17, 3
    %p142 = scmp.ne.s32.totalorder %s137, %s139
    %p143 = scmp.eq.s32.totalorder %s17, 0
    %p144 = por %p142, %p143
    %p145 = scmp.ne.s32.totalorder %s137, %s139
    %p146 = scmp.eq.s32.totalorder %s22, 3
    %p147 = por %p145, %p146
    %p148 = scmp.ne.s32.totalorder %s139, %s140
    %p149 = scmp.eq.s32.totalorder %s22, 0
    %p150 = por %p148, %p149
    %p151 = scmp.ne.s32.totalorder %s139, %s140
    %p152 = scmp.eq.s32.totalorder %s23, 3
    %p153 = por %p151, %p152
    %p155 = scmp.ne.s32.totalorder %s140, %s154
    %p156 = scmp.eq.s32.totalorder %s23, 0
    %p157 = por %p155, %p156
    %s159 = sadd.s32 %s158, 1
    %p162 = scmp.eq.s32.totalorder %s17, 3
    %p163 = scmp.ne.s32.totalorder %s158, %s160
    %p164 = scmp.eq.s32.totalorder %s17, 0
    %p165 = por %p163, %p164
    %p166 = scmp.ne.s32.totalorder %s158, %s160
    %p167 = scmp.eq.s32.totalorder %s22, 3
    %p168 = por %p166, %p167
    %p169 = scmp.ne.s32.totalorder %s160, %s161
    %p170 = scmp.eq.s32.totalorder %s22, 0
    %p171 = por %p169, %p170
    %p172 = scmp.ne.s32.totalorder %s160, %s161
    %p173 = scmp.eq.s32.totalorder %s23, 3
    %p174 = por %p172, %p173
    %p176 = scmp.ne.s32.totalorder %s161, %s175
    %p177 = scmp.eq.s32.totalorder %s23, 0
    %p178 = por %p176, %p177
    %s180 = sadd.s32 %s179, 1
    %p183 = scmp.eq.s32.totalorder %s17, 3
    %p184 = scmp.ne.s32.totalorder %s179, %s181
    %p185 = scmp.eq.s32.totalorder %s17, 0
    %p186 = por %p184, %p185
    %p187 = scmp.ne.s32.totalorder %s179, %s181
    %p188 = scmp.eq.s32.totalorder %s22, 3
    %p189 = por %p187, %p188
    %p190 = scmp.ne.s32.totalorder %s181, %s182
    %p191 = scmp.eq.s32.totalorder %s22, 0
    %p192 = por %p190, %p191
    %p193 = scmp.ne.s32.totalorder %s181, %s182
    %p194 = scmp.eq.s32.totalorder %s23, 3
    %p195 = por %p193, %p194
    %p197 = scmp.ne.s32.totalorder %s182, %s196
    %p198 = scmp.eq.s32.totalorder %s23, 0
    %p199 = por %p197, %p198
    %s201 = sadd.s32 %s200, 1
    %p204 = scmp.eq.s32.totalorder %s17, 3
    %p205 = scmp.ne.s32.totalorder %s200, %s202
    %p206 = scmp.eq.s32.totalorder %s17, 0
    %p207 = por %p205, %p206
    %p208 = scmp.ne.s32.totalorder %s200, %s202
    %p209 = scmp.eq.s32.totalorder %s22, 3
    %p210 = por %p208, %p209
    %p211 = scmp.ne.s32.totalorder %s202, %s203
    %p212 = scmp.eq.s32.totalorder %s22, 0
    %p213 = por %p211, %p212
    %p214 = scmp.ne.s32.totalorder %s202, %s203
    %p215 = scmp.eq.s32.totalorder %s23, 3
    %p216 = por %p214, %p215
    %p218 = scmp.ne.s32.totalorder %s203, %s217
    %p219 = scmp.eq.s32.totalorder %s23, 0
    %p220 = por %p218, %p219
    %s222 = sadd.s32 %s221, 1
    %p225 = scmp.eq.s32.totalorder %s17, 3
    %p226 = scmp.ne.s32.totalorder %s221, %s223
    %p227 = scmp.eq.s32.totalorder %s17, 0
    %p228 = por %p226, %p227
    %p229 = scmp.ne.s32.totalorder %s221, %s223
    %p230 = scmp.eq.s32.totalorder %s22, 3
    %p231 = por %p229, %p230
    %p232 = scmp.ne.s32.totalorder %s223, %s224
    %p233 = scmp.eq.s32.totalorder %s22, 0
    %p234 = por %p232, %p233
    %p235 = scmp.ne.s32.totalorder %s223, %s224
    %p236 = scmp.eq.s32.totalorder %s23, 3
    %p237 = por %p235, %p236
    %p239 = scmp.ne.s32.totalorder %s224, %s238
    %p240 = scmp.eq.s32.totalorder %s23, 0
    %p241 = por %p239, %p240
    %s243 = sadd.s32 %s242, 1
    %p246 = scmp.eq.s32.totalorder %s17, 3
    %p247 = scmp.ne.s32.totalorder %s242, %s244
    %p248 = scmp.eq.s32.totalorder %s17, 0
    %p249 = por %p247, %p248
    %p250 = scmp.ne.s32.totalorder %s242, %s244
    %p251 = scmp.eq.s32.totalorder %s22, 3
    %p252 = por %p250, %p251
    %p253 = scmp.ne.s32.totalorder %s244, %s245
    %p254 = scmp.eq.s32.totalorder %s22, 0
    %p255 = por %p253, %p254
    %p256 = scmp.ne.s32.totalorder %s244, %s245
    %p257 = scmp.eq.s32.totalorder %s23, 3
    %p258 = por %p256, %p257
    %p260 = scmp.ne.s32.totalorder %s245, %s259
    %p261 = scmp.eq.s32.totalorder %s23, 0
    %p262 = por %p260, %p261
    %s263 = ssub.s32 %s24, %s36
    %s264 = ssub.s32 %s25, %s32
    %s265 = sor.u32 %s263, %s264
    %p266 = scmp.eq.s32.totalorder %s265, 0
    %s268 = sadd.s32 %s267, 1
    %s269 = scalar_select %p266, %s267, %s268
    %p272 = pneg %p266
    %p273 = scmp.eq.s32.totalorder %s17, 3
    %p274 = por %p272, %p273
    %p275 = scmp.ne.s32.totalorder %s267, %s270
    %p276 = scmp.eq.s32.totalorder %s17, 0
    %p277 = por %p275, %p276
    %p278 = scmp.ne.s32.totalorder %s267, %s270
    %p279 = scmp.eq.s32.totalorder %s22, 3
    %p280 = por %p278, %p279
    %p281 = scmp.ne.s32.totalorder %s270, %s271
    %p282 = scmp.eq.s32.totalorder %s22, 0
    %p283 = por %p281, %p282
    %p284 = scmp.ne.s32.totalorder %s270, %s271
    %p285 = scmp.eq.s32.totalorder %s23, 3
    %p286 = por %p284, %p285
    %p288 = scmp.ne.s32.totalorder %s271, %s287
    %p289 = scmp.eq.s32.totalorder %s23, 0
    %p290 = por %p288, %p289
    %s291 = ssub.s32 %s24, %s36
    %s292 = ssub.s32 %s25, %s32
    %s293 = sor.u32 %s291, %s292
    %p294 = scmp.eq.s32.totalorder %s293, 0
    %s296 = sadd.s32 %s295, 1
    %s297 = scalar_select %p294, %s295, %s296
    %p300 = pneg %p294
    %p301 = scmp.eq.s32.totalorder %s17, 3
    %p302 = por %p300, %p301
    %p303 = scmp.ne.s32.totalorder %s295, %s298
    %p304 = scmp.eq.s32.totalorder %s17, 0
    %p305 = por %p303, %p304
    %p306 = scmp.ne.s32.totalorder %s295, %s298
    %p307 = scmp.eq.s32.totalorder %s22, 3
    %p308 = por %p306, %p307
    %p309 = scmp.ne.s32.totalorder %s298, %s299
    %p310 = scmp.eq.s32.totalorder %s22, 0
    %p311 = por %p309, %p310
    %p312 = scmp.ne.s32.totalorder %s298, %s299
    %p313 = scmp.eq.s32.totalorder %s23, 3
    %p314 = por %p312, %p313
    %p316 = scmp.ne.s32.totalorder %s299, %s315
    %p317 = scmp.eq.s32.totalorder %s23, 0
    %p318 = por %p316, %p317
    %p319 = scmp.le.s32.totalorder 1, %s17
    %p320 = scmp.lt.s32.totalorder %s17, 5
    %p321 = pnand %p319, %p320
    %p322 = pneg %p321
    // Predicated region
    $region9: #{tpu_custom_call.1} parent=5 // pred_check
      _
    $region10: #{tpu_custom_call.1} parent=5 // pred_check_branch
      %324 = sbr.rel (%p321) target = $region12
    $region11: #{tpu_custom_call.1} parent=5 // pred_region
      %s325 = ssub.s32 %s17, 1
      // Predicated region
      $region13: #{tpu_custom_call.1} parent=11 // pred_check
        %p326 = pneg %p150
      $region14: #{tpu_custom_call.1} parent=11 // pred_check_branch
        %328 = sbr.rel (%p326) target = $region16
      $region15: #{tpu_custom_call.1} parent=11 // pred_region
        _
      $region16: #{tpu_custom_call.1} parent=11 // pred_fallthru
        _
      // Predicated region
      $region17: #{tpu_custom_call.1} parent=11 // pred_check
        %p329 = pneg %p171
      $region18: #{tpu_custom_call.1} parent=11 // pred_check_branch
        %331 = sbr.rel (%p329) target = $region20
      $region19: #{tpu_custom_call.1} parent=11 // pred_region
        _
      $region20: #{tpu_custom_call.1} parent=11 // pred_fallthru
        _
      // Predicated region
      $region21: #{tpu_custom_call.1} parent=11 // pred_check
        %p332 = pneg %p192
      $region22: #{tpu_custom_call.1} parent=11 // pred_check_branch
        %334 = sbr.rel (%p332) target = $region24
      $region23: #{tpu_custom_call.1} parent=11 // pred_region
        _
      $region24: #{tpu_custom_call.1} parent=11 // pred_fallthru
        _
      // Predicated region
      $region25: #{tpu_custom_call.1} parent=11 // pred_check
        %p335 = pneg %p213
      $region26: #{tpu_custom_call.1} parent=11 // pred_check_branch
        %337 = sbr.rel (%p335) target = $region28
      $region27: #{tpu_custom_call.1} parent=11 // pred_region
        _
      $region28: #{tpu_custom_call.1} parent=11 // pred_fallthru
        _
      // Predicated region
      $region29: #{tpu_custom_call.1} parent=11 // pred_check
        %p338 = pneg %p234
      $region30: #{tpu_custom_call.1} parent=11 // pred_check_branch
        %340 = sbr.rel (%p338) target = $region32
      $region31: #{tpu_custom_call.1} parent=11 // pred_region
        _
      $region32: #{tpu_custom_call.1} parent=11 // pred_fallthru
        _
      // Predicated region
      $region33: #{tpu_custom_call.1} parent=11 // pred_check
        %p341 = pneg %p255
      $region34: #{tpu_custom_call.1} parent=11 // pred_check_branch
        %343 = sbr.rel (%p341) target = $region36
      $region35: #{tpu_custom_call.1} parent=11 // pred_region
        _
      $region36: #{tpu_custom_call.1} parent=11 // pred_fallthru
        _
    $region12: #{tpu_custom_call.1} parent=5 // pred_fallthru
      _
    %p344 = scmp.lt.s32.totalorder %s17, 4
    // Predicated region
    $region37: #{tpu_custom_call.1} parent=5 // pred_check
      %p345 = pneg %p344
    $region38: #{tpu_custom_call.1} parent=5 // pred_check_branch
      %347 = sbr.rel (%p345) target = $region40
    $region39: #{tpu_custom_call.1} parent=5 // pred_region
      // Predicated region
      $region41: #{tpu_custom_call.1} parent=39 // pred_check
        %p348 = pneg %p59
      $region42: #{tpu_custom_call.1} parent=39 // pred_check_branch
        %350 = sbr.rel (%p348) target = $region44
      $region43: #{tpu_custom_call.1} parent=39 // pred_region
        %s351 = smul.u32 %s25, 2
        %s352 = ssub.s32 %s351, 1
        %p353 = scmp.gt.s32.totalorder %s352, 0
        %s354 = scalar_select %p353, %s352, 0
        %p355 = scmp.lt.s32.totalorder %s24, 1
        %s356 = scalar_select %p355, %s24, 1
        %p357 = scmp.lt.s32.totalorder %s354, 3
        %s358 = scalar_select %p357, %s354, 3
        %s359 = smul.addr %s356, 4
        %s360 = sadd.s32 %s358, %s359
        %s361 = smul.addr %s360, 8
        %s362 = scalar_lea.vmem %s0, %s361
        %s363 = smul.u32 %s25, 2
        %s364 = ssub.s32 %s363, 1
        %p365 = scmp.gt.s32.totalorder %s364, 0
        %s366 = scalar_select %p365, %s364, 0
      $region44: #{tpu_custom_call.1} parent=39 // pred_fallthru
        _
      // Predicated region
      $region45: #{tpu_custom_call.1} parent=39 // pred_check
        %p367 = pneg %p87
      $region46: #{tpu_custom_call.1} parent=39 // pred_check_branch
        %369 = sbr.rel (%p367) target = $region48
      $region47: #{tpu_custom_call.1} parent=39 // pred_region
        %s370 = smul.u32 2, %s25
        %p371 = scmp.lt.s32.totalorder %s24, 1
        %s372 = scalar_select %p371, %s24, 1
        %p373 = scmp.lt.s32.totalorder %s370, 3
        %s374 = scalar_select %p373, %s370, 3
        %s375 = smul.addr %s372, 4
        %s376 = sadd.s32 %s374, %s375
        %s377 = smul.addr %s376, 8
        %s378 = scalar_lea.vmem %s1, %s377
        %s379 = smul.u32 2, %s25
      $region48: #{tpu_custom_call.1} parent=39 // pred_fallthru
        _
      // Predicated region
      $region49: #{tpu_custom_call.1} parent=39 // pred_check
        %p380 = pneg %p123
      $region50: #{tpu_custom_call.1} parent=39 // pred_check_branch
        %382 = sbr.rel (%p380) target = $region52
      $region51: #{tpu_custom_call.1} parent=39 // pred_region
        %s383 = sadd.s32 %s25, 1
        %s384 = smul.u32 %s383, 2
        %p385 = scmp.lt.s32.totalorder %s384, 3
        %s386 = scalar_select %p385, %s384, 3
        %p387 = scmp.lt.s32.totalorder %s24, 1
        %s388 = scalar_select %p387, %s24, 1
        %p389 = scmp.lt.s32.totalorder %s386, 3
        %s390 = scalar_select %p389, %s386, 3
        %s391 = smul.addr %s388, 4
        %s392 = sadd.s32 %s390, %s391
        %s393 = smul.addr %s392, 8
        %s394 = scalar_lea.vmem %s2, %s393
        %s395 = sadd.s32 %s25, 1
        %s396 = smul.u32 %s395, 2
        %p397 = scmp.lt.s32.totalorder %s396, 3
        %s398 = scalar_select %p397, %s396, 3
      $region52: #{tpu_custom_call.1} parent=39 // pred_fallthru
        _
    $region40: #{tpu_custom_call.1} parent=5 // pred_fallthru
      _
    %p399 = scmp.le.s32.totalorder 1, %s17
    %p400 = scmp.lt.s32.totalorder %s17, 5
    %p401 = pnand %p399, %p400
    %p402 = pneg %p401
    // Predicated region
    $region53: #{tpu_custom_call.1} parent=5 // pred_check
      _
    $region54: #{tpu_custom_call.1} parent=5 // pred_check_branch
      %404 = sbr.rel (%p401) target = $region56
    $region55: #{tpu_custom_call.1} parent=5 // pred_region
      %s405 = ssub.s32 %s17, 1
      %s406 = smul.u32 %s27, 2
      %s407 = ssub.s32 %s406, 1
      %p408 = scmp.gt.s32.totalorder %s407, 0
      %s409 = scalar_select %p408, %s407, 0
      %p410 = scmp.lt.s32.totalorder %s26, 1
      %s411 = scalar_select %p410, %s26, 1
      %p412 = scmp.lt.s32.totalorder %s409, 3
      %s413 = scalar_select %p412, %s409, 3
      %s414 = smul.addr %s411, 4
      %s415 = sadd.s32 %s413, %s414
      %s416 = smul.addr %s415, 8
      %s417 = scalar_lea.vmem %s0, %s416
      %p418 = pneg %p65
      %p419 = pneg %p62
      %s420 = smul.u32 2, %s27
      %p421 = scmp.lt.s32.totalorder %s26, 1
      %s422 = scalar_select %p421, %s26, 1
      %p423 = scmp.lt.s32.totalorder %s420, 3
      %s424 = scalar_select %p423, %s420, 3
      %s425 = smul.addr %s422, 4
      %s426 = sadd.s32 %s424, %s425
      %s427 = smul.addr %s426, 8
      %s428 = scalar_lea.vmem %s1, %s427
      %p429 = pneg %p93
      %p430 = pneg %p90
      %s431 = sadd.s32 %s27, 1
      %s432 = smul.u32 %s431, 2
      %p433 = scmp.lt.s32.totalorder %s432, 3
      %s434 = scalar_select %p433, %s432, 3
      %p435 = scmp.lt.s32.totalorder %s26, 1
      %s436 = scalar_select %p435, %s26, 1
      %p437 = scmp.lt.s32.totalorder %s434, 3
      %s438 = scalar_select %p437, %s434, 3
      %s439 = smul.addr %s436, 4
      %s440 = sadd.s32 %s438, %s439
      %s441 = smul.addr %s440, 8
      %s442 = scalar_lea.vmem %s2, %s441
      %p443 = pneg %p129
      %p444 = pneg %p126
      %p445 = pneg %p150
      %p446 = pneg %p147
      %p447 = pneg %p171
      %p448 = pneg %p168
      %p449 = pneg %p192
      %p450 = pneg %p189
      %p451 = pneg %p213
      %p452 = pneg %p210
      %p453 = pneg %p234
      %p454 = pneg %p231
      %p455 = pneg %p255
      %p456 = pneg %p252
      %p457 = pneg %p283
      %p458 = pneg %p280
      %s459 = smul.u32 2, %s27
      %p460 = scmp.lt.s32.totalorder %s26, 1
      %s461 = scalar_select %p460, %s26, 1
      %p462 = scmp.lt.s32.totalorder %s459, 3
      %s463 = scalar_select %p462, %s459, 3
      %s464 = smul.addr %s461, 4
      %s465 = sadd.s32 %s463, %s464
      %s466 = smul.addr %s465, 8
      %s467 = scalar_lea.vmem %s9, %s466
      %p468 = pneg %p311
      %p469 = pneg %p308
      %s470 = smul.u32 2, %s27
      %p471 = scmp.lt.s32.totalorder %s26, 1
      %s472 = scalar_select %p471, %s26, 1
      %p473 = scmp.lt.s32.totalorder %s470, 3
      %s474 = scalar_select %p473, %s470, 3
      %s475 = smul.addr %s472, 4
      %s476 = sadd.s32 %s474, %s475
      %s477 = smul.addr %s476, 8
      %s478 = scalar_lea.vmem %s10, %s477
      %s479 = smul.u32 %s27, 2
      %s480 = ssub.s32 %s479, 1
      %p481 = scmp.gt.s32.totalorder %s480, 0
      %s482 = scalar_select %p481, %s480, 0
      %p483 = scmp.lt.s32.totalorder %s26, 1
      %s484 = scalar_select %p483, %s26, 1
      %p485 = scmp.lt.s32.totalorder %s482, 3
      %s486 = scalar_select %p485, %s482, 3
      %s487 = smul.addr %s484, 4
      %s488 = sadd.s32 %s486, %s487
      %s489 = smul.addr %s488, 8
      %s490 = scalar_lea.vmem %s0, %s489
      %s491 = smul.u32 %s27, 2
      %s492 = ssub.s32 %s491, 1
      %p493 = scmp.gt.s32.totalorder %s492, 0
      %s494 = scalar_select %p493, %s492, 0
      %s495 = smul.u32 2, %s27
      %p496 = scmp.lt.s32.totalorder %s26, 1
      %s497 = scalar_select %p496, %s26, 1
      %p498 = scmp.lt.s32.totalorder %s495, 3
      %s499 = scalar_select %p498, %s495, 3
      %s500 = smul.addr %s497, 4
      %s501 = sadd.s32 %s499, %s500
      %s502 = smul.addr %s501, 8
      %s503 = scalar_lea.vmem %s1, %s502
      %s504 = smul.u32 2, %s27
      %s505 = sadd.s32 %s27, 1
      %s506 = smul.u32 %s505, 2
      %p507 = scmp.lt.s32.totalorder %s506, 3
      %s508 = scalar_select %p507, %s506, 3
      %p509 = scmp.lt.s32.totalorder %s26, 1
      %s510 = scalar_select %p509, %s26, 1
      %p511 = scmp.lt.s32.totalorder %s508, 3
      %s512 = scalar_select %p511, %s508, 3
      %s513 = smul.addr %s510, 4
      %s514 = sadd.s32 %s512, %s513
      %s515 = smul.addr %s514, 8
      %s516 = scalar_lea.vmem %s2, %s515
      %s517 = sadd.s32 %s27, 1
      %s518 = smul.u32 %s517, 2
      %p519 = scmp.lt.s32.totalorder %s518, 3
      %s520 = scalar_select %p519, %s518, 3
      %s521 = smul.u32 2, %s27
      %p522 = scmp.lt.s32.totalorder %s26, 1
      %s523 = scalar_select %p522, %s26, 1
      %p524 = scmp.lt.s32.totalorder %s521, 3
      %s525 = scalar_select %p524, %s521, 3
      %s526 = smul.addr %s523, 4
      %s527 = sadd.s32 %s525, %s526
      %s528 = smul.addr %s527, 8
      %s529 = scalar_lea.vmem %s9, %s528
      %s530 = smul.u32 2, %s27
      %s531 = smul.u32 2, %s27
      %p532 = scmp.lt.s32.totalorder %s26, 1
      %s533 = scalar_select %p532, %s26, 1
      %p534 = scmp.lt.s32.totalorder %s531, 3
      %s535 = scalar_select %p534, %s531, 3
      %s536 = smul.addr %s533, 4
      %s537 = sadd.s32 %s535, %s536
      %s538 = smul.addr %s537, 8
      %s539 = scalar_lea.vmem %s10, %s538
      %s540 = smul.u32 2, %s27
      %v541 = vld [vmem:[%s503] sm:$0xff]
      %v542 = vld [vmem:[%s503 + $0x8] sm:$0xff]
      %vm543 = vcmask 31744
      %544 = vst.msk [vmem:[#allocation2 + $0x5] sm:$0xff] %vm543, %v541
      %545 = vst.msk [vmem:[#allocation2 + $0xd] sm:$0xff] %vm543, %v542
      %p546 = scmp.gt.s32.totalorder %s27, 0
      %v547 = vld [vmem:[%s490 + $0x3] sm:$0x1f]
      %s548 = scalar_select %p546, 1, 0
      %v549 = vstv %s548
      %vm550 = vcmp.eq.s32.totalorder %v549, 1
      %v551 = vsel %vm550, %v547, 0.0
      %p552 = scmp.lt.s32.totalorder %s27, 1
      %v553 = vld [vmem:[%s516] sm:$0x1f]
      %s554 = scalar_select %p552, 1, 0
      %v555 = vstv %s554
      %vm556 = vcmp.eq.s32.totalorder %v555, 1
      %v557 = vsel %vm556, %v553, 0.0
      %vm558 = vcmask 28672
      %559 = vst.msk [vmem:[#allocation2] sm:$0x1f] %vm558, %v551
      %560 = vst.msk [vmem:[#allocation2 + $0x15] sm:$0x1f] %vm558, %v557
      %v561 = vld [vmem:[#allocation2] sm:$0xff]
      %v562 = vld [vmem:[#allocation2 + $0x8] sm:$0xff]
      %v563 = vld [vmem:[%s3] sm:$0xf]
      %v564 = vld [vmem:[#allocation2 + $0x1] sm:$0xff]
      %v565 = vld [vmem:[#allocation2 + $0x9] sm:$0xff]
      %s566 = scalar_lea.vmem %s3, 4
      %v567 = vld [vmem:[%s566] sm:$0xf]
      %v569 = vsel %vm543, %v564, 0
      %v572 = vsel %vm543, %v565, 0
      %vm574 = vcmask 1043456
      %v576 = vsel %vm574, %v567, 0
      %578 = vmatprep.subr.mxu0 0.0
      %579 = vmatpush1.msra.mxu0 %v576
      %580 = vmatprep.subr.mxu0 0.0
      %581 = vmatpush1.msra.mxu0 0.0
      %582 = vmatprep.subr.mxu0 0.0
      %583 = vmatpush1.msra.mxu0 0.0
      %584 = vmatprep.subr.mxu0 0.0
      %585 = vmatpush1.msra.mxu0 0.0
      %586 = vmatprep.subr.mxu0 0.0
      %587 = vmatpush1.msra.mxu0 0.0
      %588 = vmatprep.subr.mxu0 0.0
      %589 = vmatpush1.msra.mxu0 0.0
      %590 = vmatprep.subr.mxu0 0.0
      %591 = vmatpush1.msra.mxu0 0.0
      %592 = vmatprep.subr.mxu0 0.0
      %593 = vmatpush1.msra.mxu0 0.0
      %594 = vmatprep.subr.mxu0 0.0
      %595 = vmatpush1.msra.mxu0 0.0
      %596 = vmatprep.subr.mxu0 0.0
      %597 = vmatpush1.msra.mxu0 0.0
      %598 = vmatprep.subr.mxu0 0.0
      %599 = vmatpush1.msra.mxu0 0.0
      %600 = vmatprep.subr.mxu0 0.0
      %601 = vmatpush1.msra.mxu0 0.0
      %602 = vmatprep.subr.mxu0 0.0
      %603 = vmatpush1.msra.mxu0 0.0
      %604 = vmatprep.subr.mxu0 0.0
      %605 = vmatpush1.msra.mxu0 0.0
      %606 = vmatprep.subr.mxu0 0.0
      %607 = vmatpush1.msra.mxu0 0.0
      %608 = vmatprep.subr.mxu0 0.0
      %609 = vmatpush1.msra.mxu0 0.0
      %610 = vmatprep.subr.mxu0 0.0
      %611 = vmatpush1.msra.mxu0 0.0
      %612 = vmatprep.subr.mxu0 0.0
      %613 = vmatpush1.msra.mxu0 0.0
      %614 = vmatprep.subr.mxu0 0.0
      %615 = vmatpush1.msra.mxu0 0.0
      %616 = vmatprep.subr.mxu0 0.0
      %617 = vmatpush1.msra.mxu0 0.0
      %618 = vmatprep.subr.mxu0 0.0
      %619 = vmatpush1.msra.mxu0 0.0
      %620 = vmatprep.subr.mxu0 0.0
      %621 = vmatpush1.msra.mxu0 0.0
      %622 = vmatprep.subr.mxu0 0.0
      %623 = vmatpush1.msra.mxu0 0.0
      %624 = vmatprep.subr.mxu0 0.0
      %625 = vmatpush1.msra.mxu0 0.0
      %626 = vmatprep.subr.mxu0 0.0
      %627 = vmatpush1.msra.mxu0 0.0
      %628 = vmatprep.subr.mxu0 0.0
      %629 = vmatpush1.msra.mxu0 0.0
      %630 = vmatprep.subr.mxu0 0.0
      %631 = vmatpush1.msra.mxu0 0.0
      %632 = vmatprep.subr.mxu0 0.0
      %633 = vmatpush1.msra.mxu0 0.0
      %634 = vmatprep.subr.mxu0 0.0
      %635 = vmatpush1.msra.mxu0 0.0
      %636 = vmatprep.subr.mxu0 0.0
      %637 = vmatpush1.msra.mxu0 0.0
      %638 = vmatprep.subr.mxu0 0.0
      %639 = vmatpush1.msra.mxu0 0.0
      %640 = vmatprep.subr.mxu0 0.0
      %641 = vmatpush1.msra.mxu0 0.0
      %642 = vmatprep.mubr.f32.mxu0 0.0
      %643 = vmatmul.mubr.f32.gmra.mrb[0].mxu0 %v569
      %v644 = vpop.f32.mrb[0].mxu0
      %v645 = vadd.f32 0.0, %v644
      %v646 = vpop.f32.mrb[0].mxu0
      %647 = vmatprep.mubr.f32.mxu0 0.0
      %648 = vmatmul.mubr.f32.gmra.mrb[0].mxu0 %v572
      %v649 = vpop.f32.mrb[0].mxu0
      %v650 = vadd.f32 0.0, %v649
      %v651 = vpop.f32.mrb[0].mxu0
      %652 = vdwg.mxu0
      %v654 = vsel %vm543, %v561, 0
      %v657 = vsel %vm543, %v562, 0
      %v660 = vsel %vm574, %v563, 0
      %662 = vmatprep.subr.mxu0 0.0
      %663 = vmatpush1.msra.mxu0 %v660
      %664 = vmatprep.subr.mxu0 0.0
      %665 = vmatpush1.msra.mxu0 0.0
      %666 = vmatprep.subr.mxu0 0.0
      %667 = vmatpush1.msra.mxu0 0.0
      %668 = vmatprep.subr.mxu0 0.0
      %669 = vmatpush1.msra.mxu0 0.0
      %670 = vmatprep.subr.mxu0 0.0
      %671 = vmatpush1.msra.mxu0 0.0
      %672 = vmatprep.subr.mxu0 0.0
      %673 = vmatpush1.msra.mxu0 0.0
      %674 = vmatprep.subr.mxu0 0.0
      %675 = vmatpush1.msra.mxu0 0.0
      %676 = vmatprep.subr.mxu0 0.0
      %677 = vmatpush1.msra.mxu0 0.0
      %678 = vmatprep.subr.mxu0 0.0
      %679 = vmatpush1.msra.mxu0 0.0
      %680 = vmatprep.subr.mxu0 0.0
      %681 = vmatpush1.msra.mxu0 0.0
      %682 = vmatprep.subr.mxu0 0.0
      %683 = vmatpush1.msra.mxu0 0.0
      %684 = vmatprep.subr.mxu0 0.0
      %685 = vmatpush1.msra.mxu0 0.0
      %686 = vmatprep.subr.mxu0 0.0
      %687 = vmatpush1.msra.mxu0 0.0
      %688 = vmatprep.subr.mxu0 0.0
      %689 = vmatpush1.msra.mxu0 0.0
      %690 = vmatprep.subr.mxu0 0.0
      %691 = vmatpush1.msra.mxu0 0.0
      %692 = vmatprep.subr.mxu0 0.0
      %693 = vmatpush1.msra.mxu0 0.0
      %694 = vmatprep.subr.mxu0 0.0
      %695 = vmatpush1.msra.mxu0 0.0
      %696 = vmatprep.subr.mxu0 0.0
      %697 = vmatpush1.msra.mxu0 0.0
      %698 = vmatprep.subr.mxu0 0.0
      %699 = vmatpush1.msra.mxu0 0.0
      %700 = vmatprep.subr.mxu0 0.0
      %701 = vmatpush1.msra.mxu0 0.0
      %702 = vmatprep.subr.mxu0 0.0
      %703 = vmatpush1.msra.mxu0 0.0
      %704 = vmatprep.subr.mxu0 0.0
      %705 = vmatpush1.msra.mxu0 0.0
      %706 = vmatprep.subr.mxu0 0.0
      %707 = vmatpush1.msra.mxu0 0.0
      %708 = vmatprep.subr.mxu0 0.0
      %709 = vmatpush1.msra.mxu0 0.0
      %710 = vmatprep.subr.mxu0 0.0
      %711 = vmatpush1.msra.mxu0 0.0
      %712 = vmatprep.subr.mxu0 0.0
      %713 = vmatpush1.msra.mxu0 0.0
      %714 = vmatprep.subr.mxu0 0.0
      %715 = vmatpush1.msra.mxu0 0.0
      %716 = vmatprep.subr.mxu0 0.0
      %717 = vmatpush1.msra.mxu0 0.0
      %718 = vmatprep.subr.mxu0 0.0
      %719 = vmatpush1.msra.mxu0 0.0
      %720 = vmatprep.subr.mxu0 0.0
      %721 = vmatpush1.msra.mxu0 0.0
      %722 = vmatprep.subr.mxu0 0.0
      %723 = vmatpush1.msra.mxu0 0.0
      %724 = vmatprep.subr.mxu0 0.0
      %725 = vmatpush1.msra.mxu0 0.0
      %726 = vmatprep.mubr.f32.mxu0 0.0
      %727 = vmatmul.mubr.f32.gmra.mrb[0].mxu0 %v654
      %v728 = vpop.f32.mrb[0].mxu0
      %v729 = vadd.f32 %v645, %v728
      %v730 = vpop.f32.mrb[0].mxu0
      %731 = vmatprep.mubr.f32.mxu0 0.0
      %732 = vmatmul.mubr.f32.gmra.mrb[0].mxu0 %v657
      %v733 = vpop.f32.mrb[0].mxu0
      %v734 = vadd.f32 %v650, %v733
      %v735 = vpop.f32.mrb[0].mxu0
      %736 = vdwg.mxu0
      %v737 = vld [vmem:[#allocation2 + $0x2] sm:$0xff]
      %v738 = vld [vmem:[#allocation2 + $0xa] sm:$0xff]
      %s739 = scalar_lea.vmem %s3, 8
      %v740 = vld [vmem:[%s739] sm:$0xf]
      %v742 = vsel %vm543, %v737, 0
      %v745 = vsel %vm543, %v738, 0
      %v748 = vsel %vm574, %v740, 0
      %750 = vmatprep.subr.mxu0 0.0
      %751 = vmatpush1.msra.mxu0 %v748
      %752 = vmatprep.subr.mxu0 0.0
      %753 = vmatpush1.msra.mxu0 0.0
      %754 = vmatprep.subr.mxu0 0.0
      %755 = vmatpush1.msra.mxu0 0.0
      %756 = vmatprep.subr.mxu0 0.0
      %757 = vmatpush1.msra.mxu0 0.0
      %758 = vmatprep.subr.mxu0 0.0
      %759 = vmatpush1.msra.mxu0 0.0
      %760 = vmatprep.subr.mxu0 0.0
      %761 = vmatpush1.msra.mxu0 0.0
      %762 = vmatprep.subr.mxu0 0.0
      %763 = vmatpush1.msra.mxu0 0.0
      %764 = vmatprep.subr.mxu0 0.0
      %765 = vmatpush1.msra.mxu0 0.0
      %766 = vmatprep.subr.mxu0 0.0
      %767 = vmatpush1.msra.mxu0 0.0
      %768 = vmatprep.subr.mxu0 0.0
      %769 = vmatpush1.msra.mxu0 0.0
      %770 = vmatprep.subr.mxu0 0.0
      %771 = vmatpush1.msra.mxu0 0.0
      %772 = vmatprep.subr.mxu0 0.0
      %773 = vmatpush1.msra.mxu0 0.0
      %774 = vmatprep.subr.mxu0 0.0
      %775 = vmatpush1.msra.mxu0 0.0
      %776 = vmatprep.subr.mxu0 0.0
      %777 = vmatpush1.msra.mxu0 0.0
      %778 = vmatprep.subr.mxu0 0.0
      %779 = vmatpush1.msra.mxu0 0.0
      %780 = vmatprep.subr.mxu0 0.0
      %781 = vmatpush1.msra.mxu0 0.0
      %782 = vmatprep.subr.mxu0 0.0
      %783 = vmatpush1.msra.mxu0 0.0
      %784 = vmatprep.subr.mxu0 0.0
      %785 = vmatpush1.msra.mxu0 0.0
      %786 = vmatprep.subr.mxu0 0.0
      %787 = vmatpush1.msra.mxu0 0.0
      %788 = vmatprep.subr.mxu0 0.0
      %789 = vmatpush1.msra.mxu0 0.0
      %790 = vmatprep.subr.mxu0 0.0
      %791 = vmatpush1.msra.mxu0 0.0
      %792 = vmatprep.subr.mxu0 0.0
      %793 = vmatpush1.msra.mxu0 0.0
      %794 = vmatprep.subr.mxu0 0.0
      %795 = vmatpush1.msra.mxu0 0.0
      %796 = vmatprep.subr.mxu0 0.0
      %797 = vmatpush1.msra.mxu0 0.0
      %798 = vmatprep.subr.mxu0 0.0
      %799 = vmatpush1.msra.mxu0 0.0
      %800 = vmatprep.subr.mxu0 0.0
      %801 = vmatpush1.msra.mxu0 0.0
      %802 = vmatprep.subr.mxu0 0.0
      %803 = vmatpush1.msra.mxu0 0.0
      %804 = vmatprep.subr.mxu0 0.0
      %805 = vmatpush1.msra.mxu0 0.0
      %806 = vmatprep.subr.mxu0 0.0
      %807 = vmatpush1.msra.mxu0 0.0
      %808 = vmatprep.subr.mxu0 0.0
      %809 = vmatpush1.msra.mxu0 0.0
      %810 = vmatprep.subr.mxu0 0.0
      %811 = vmatpush1.msra.mxu0 0.0
      %812 = vmatprep.subr.mxu0 0.0
      %813 = vmatpush1.msra.mxu0 0.0
      %814 = vmatprep.mubr.f32.mxu0 0.0
      %815 = vmatmul.mubr.f32.gmra.mrb[0].mxu0 %v742
      %v816 = vpop.f32.mrb[0].mxu0
      %v817 = vadd.f32 0.0, %v816
      %v818 = vpop.f32.mrb[0].mxu0
      %819 = vmatprep.mubr.f32.mxu0 0.0
      %820 = vmatmul.mubr.f32.gmra.mrb[0].mxu0 %v745
      %v821 = vpop.f32.mrb[0].mxu0
      %v822 = vadd.f32 0.0, %v821
      %v823 = vpop.f32.mrb[0].mxu0
      %824 = vdwg.mxu0
      %v825 = vadd.f32 %v729, %v817
      %v826 = vadd.f32 %v734, %v822
      %v827 = vld [vmem:[#allocation2 + $0x3] sm:$0xff]
      %v828 = vld [vmem:[#allocation2 + $0xb] sm:$0xff]
      %s829 = scalar_lea.vmem %s3, 12
      %v830 = vld [vmem:[%s829] sm:$0xf]
      %v832 = vsel %vm543, %v827, 0
      %v835 = vsel %vm543, %v828, 0
      %v838 = vsel %vm574, %v830, 0
      %840 = vmatprep.subr.mxu0 0.0
      %841 = vmatpush1.msra.mxu0 %v838
      %842 = vmatprep.subr.mxu0 0.0
      %843 = vmatpush1.msra.mxu0 0.0
      %844 = vmatprep.subr.mxu0 0.0
      %845 = vmatpush1.msra.mxu0 0.0
      %846 = vmatprep.subr.mxu0 0.0
      %847 = vmatpush1.msra.mxu0 0.0
      %848 = vmatprep.subr.mxu0 0.0
      %849 = vmatpush1.msra.mxu0 0.0
      %850 = vmatprep.subr.mxu0 0.0
      %851 = vmatpush1.msra.mxu0 0.0
      %852 = vmatprep.subr.mxu0 0.0
      %853 = vmatpush1.msra.mxu0 0.0
      %854 = vmatprep.subr.mxu0 0.0
      %855 = vmatpush1.msra.mxu0 0.0
      %856 = vmatprep.subr.mxu0 0.0
      %857 = vmatpush1.msra.mxu0 0.0
      %858 = vmatprep.subr.mxu0 0.0
      %859 = vmatpush1.msra.mxu0 0.0
      %860 = vmatprep.subr.mxu0 0.0
      %861 = vmatpush1.msra.mxu0 0.0
      %862 = vmatprep.subr.mxu0 0.0
      %863 = vmatpush1.msra.mxu0 0.0
      %864 = vmatprep.subr.mxu0 0.0
      %865 = vmatpush1.msra.mxu0 0.0
      %866 = vmatprep.subr.mxu0 0.0
      %867 = vmatpush1.msra.mxu0 0.0
      %868 = vmatprep.subr.mxu0 0.0
      %869 = vmatpush1.msra.mxu0 0.0
      %870 = vmatprep.subr.mxu0 0.0
      %871 = vmatpush1.msra.mxu0 0.0
      %872 = vmatprep.subr.mxu0 0.0
      %873 = vmatpush1.msra.mxu0 0.0
      %874 = vmatprep.subr.mxu0 0.0
      %875 = vmatpush1.msra.mxu0 0.0
      %876 = vmatprep.subr.mxu0 0.0
      %877 = vmatpush1.msra.mxu0 0.0
      %878 = vmatprep.subr.mxu0 0.0
      %879 = vmatpush1.msra.mxu0 0.0
      %880 = vmatprep.subr.mxu0 0.0
      %881 = vmatpush1.msra.mxu0 0.0
      %882 = vmatprep.subr.mxu0 0.0
      %883 = vmatpush1.msra.mxu0 0.0
      %884 = vmatprep.subr.mxu0 0.0
      %885 = vmatpush1.msra.mxu0 0.0
      %886 = vmatprep.subr.mxu0 0.0
      %887 = vmatpush1.msra.mxu0 0.0
      %888 = vmatprep.subr.mxu0 0.0
      %889 = vmatpush1.msra.mxu0 0.0
      %890 = vmatprep.subr.mxu0 0.0
      %891 = vmatpush1.msra.mxu0 0.0
      %892 = vmatprep.subr.mxu0 0.0
      %893 = vmatpush1.msra.mxu0 0.0
      %894 = vmatprep.subr.mxu0 0.0
      %895 = vmatpush1.msra.mxu0 0.0
      %896 = vmatprep.subr.mxu0 0.0
      %897 = vmatpush1.msra.mxu0 0.0
      %898 = vmatprep.subr.mxu0 0.0
      %899 = vmatpush1.msra.mxu0 0.0
      %900 = vmatprep.subr.mxu0 0.0
      %901 = vmatpush1.msra.mxu0 0.0
      %902 = vmatprep.subr.mxu0 0.0
      %903 = vmatpush1.msra.mxu0 0.0
      %904 = vmatprep.mubr.f32.mxu0 0.0
      %905 = vmatmul.mubr.f32.gmra.mrb[0].mxu0 %v832
      %v906 = vpop.f32.mrb[0].mxu0
      %v907 = vadd.f32 0.0, %v906
      %v908 = vpop.f32.mrb[0].mxu0
      %909 = vmatprep.mubr.f32.mxu0 0.0
      %910 = vmatmul.mubr.f32.gmra.mrb[0].mxu0 %v835
      %v911 = vpop.f32.mrb[0].mxu0
      %v912 = vadd.f32 0.0, %v911
      %v913 = vpop.f32.mrb[0].mxu0
      %914 = vdwg.mxu0
      %v915 = vadd.f32 %v825, %v907
      %v916 = vadd.f32 %v826, %v912
      %v917 = vld [vmem:[#allocation2 + $0x4] sm:$0xff]
      %v918 = vld [vmem:[#allocation2 + $0xc] sm:$0xff]
      %s919 = scalar_lea.vmem %s3, 16
      %v920 = vld [vmem:[%s919] sm:$0xf]
      %v922 = vsel %vm543, %v917, 0
      %v925 = vsel %vm543, %v918, 0
      %v928 = vsel %vm574, %v920, 0
      %930 = vmatprep.subr.mxu0 0.0
      %931 = vmatpush1.msra.mxu0 %v928
      %932 = vmatprep.subr.mxu0 0.0
      %933 = vmatpush1.msra.mxu0 0.0
      %934 = vmatprep.subr.mxu0 0.0
      %935 = vmatpush1.msra.mxu0 0.0
      %936 = vmatprep.subr.mxu0 0.0
      %937 = vmatpush1.msra.mxu0 0.0
      %938 = vmatprep.subr.mxu0 0.0
      %939 = vmatpush1.msra.mxu0 0.0
      %940 = vmatprep.subr.mxu0 0.0
      %941 = vmatpush1.msra.mxu0 0.0
      %942 = vmatprep.subr.mxu0 0.0
      %943 = vmatpush1.msra.mxu0 0.0
      %944 = vmatprep.subr.mxu0 0.0
      %945 = vmatpush1.msra.mxu0 0.0
      %946 = vmatprep.subr.mxu0 0.0
      %947 = vmatpush1.msra.mxu0 0.0
      %948 = vmatprep.subr.mxu0 0.0
      %949 = vmatpush1.msra.mxu0 0.0
      %950 = vmatprep.subr.mxu0 0.0
      %951 = vmatpush1.msra.mxu0 0.0
      %952 = vmatprep.subr.mxu0 0.0
      %953 = vmatpush1.msra.mxu0 0.0
      %954 = vmatprep.subr.mxu0 0.0
      %955 = vmatpush1.msra.mxu0 0.0
      %956 = vmatprep.subr.mxu0 0.0
      %957 = vmatpush1.msra.mxu0 0.0
      %958 = vmatprep.subr.mxu0 0.0
      %959 = vmatpush1.msra.mxu0 0.0
      %960 = vmatprep.subr.mxu0 0.0
      %961 = vmatpush1.msra.mxu0 0.0
      %962 = vmatprep.subr.mxu0 0.0
      %963 = vmatpush1.msra.mxu0 0.0
      %964 = vmatprep.subr.mxu0 0.0
      %965 = vmatpush1.msra.mxu0 0.0
      %966 = vmatprep.subr.mxu0 0.0
      %967 = vmatpush1.msra.mxu0 0.0
      %968 = vmatprep.subr.mxu0 0.0
      %969 = vmatpush1.msra.mxu0 0.0
      %970 = vmatprep.subr.mxu0 0.0
      %971 = vmatpush1.msra.mxu0 0.0
      %972 = vmatprep.subr.mxu0 0.0
      %973 = vmatpush1.msra.mxu0 0.0
      %974 = vmatprep.subr.mxu0 0.0
      %975 = vmatpush1.msra.mxu0 0.0
      %976 = vmatprep.subr.mxu0 0.0
      %977 = vmatpush1.msra.mxu0 0.0
      %978 = vmatprep.subr.mxu0 0.0
      %979 = vmatpush1.msra.mxu0 0.0
      %980 = vmatprep.subr.mxu0 0.0
      %981 = vmatpush1.msra.mxu0 0.0
      %982 = vmatprep.subr.mxu0 0.0
      %983 = vmatpush1.msra.mxu0 0.0
      %984 = vmatprep.subr.mxu0 0.0
      %985 = vmatpush1.msra.mxu0 0.0
      %986 = vmatprep.subr.mxu0 0.0
      %987 = vmatpush1.msra.mxu0 0.0
      %988 = vmatprep.subr.mxu0 0.0
      %989 = vmatpush1.msra.mxu0 0.0
      %990 = vmatprep.subr.mxu0 0.0
      %991 = vmatpush1.msra.mxu0 0.0
      %992 = vmatprep.subr.mxu0 0.0
      %993 = vmatpush1.msra.mxu0 0.0
      %994 = vmatprep.mubr.f32.mxu0 0.0
      %995 = vmatmul.mubr.f32.gmra.mrb[0].mxu0 %v922
      %v996 = vpop.f32.mrb[0].mxu0
      %v997 = vadd.f32 0.0, %v996
      %v998 = vpop.f32.mrb[0].mxu0
      %999 = vmatprep.mubr.f32.mxu0 0.0
      %1000 = vmatmul.mubr.f32.gmra.mrb[0].mxu0 %v925
      %v1001 = vpop.f32.mrb[0].mxu0
      %v1002 = vadd.f32 0.0, %v1001
      %v1003 = vpop.f32.mrb[0].mxu0
      %1004 = vdwg.mxu0
      %v1005 = vadd.f32 %v915, %v997
      %v1006 = vadd.f32 %v916, %v1002
      %v1007 = vld [vmem:[#allocation2 + $0x5] sm:$0xff]
      %v1008 = vld [vmem:[#allocation2 + $0xd] sm:$0xff]
      %s1009 = scalar_lea.vmem %s3, 20
      %v1010 = vld [vmem:[%s1009] sm:$0xf]
      %v1012 = vsel %vm543, %v1007, 0
      %v1015 = vsel %vm543, %v1008, 0
      %v1018 = vsel %vm574, %v1010, 0
      %1020 = vmatprep.subr.mxu0 0.0
      %1021 = vmatpush1.msra.mxu0 %v1018
      %1022 = vmatprep.subr.mxu0 0.0
      %1023 = vmatpush1.msra.mxu0 0.0
      %1024 = vmatprep.subr.mxu0 0.0
      %1025 = vmatpush1.msra.mxu0 0.0
      %1026 = vmatprep.subr.mxu0 0.0
      %1027 = vmatpush1.msra.mxu0 0.0
      %1028 = vmatprep.subr.mxu0 0.0
      %1029 = vmatpush1.msra.mxu0 0.0
      %1030 = vmatprep.subr.mxu0 0.0
      %1031 = vmatpush1.msra.mxu0 0.0
      %1032 = vmatprep.subr.mxu0 0.0
      %1033 = vmatpush1.msra.mxu0 0.0
      %1034 = vmatprep.subr.mxu0 0.0
      %1035 = vmatpush1.msra.mxu0 0.0
      %1036 = vmatprep.subr.mxu0 0.0
      %1037 = vmatpush1.msra.mxu0 0.0
      %1038 = vmatprep.subr.mxu0 0.0
      %1039 = vmatpush1.msra.mxu0 0.0
      %1040 = vmatprep.subr.mxu0 0.0
      %1041 = vmatpush1.msra.mxu0 0.0
      %1042 = vmatprep.subr.mxu0 0.0
      %1043 = vmatpush1.msra.mxu0 0.0
      %1044 = vmatprep.subr.mxu0 0.0
      %1045 = vmatpush1.msra.mxu0 0.0
      %1046 = vmatprep.subr.mxu0 0.0
      %1047 = vmatpush1.msra.mxu0 0.0
      %1048 = vmatprep.subr.mxu0 0.0
      %1049 = vmatpush1.msra.mxu0 0.0
      %1050 = vmatprep.subr.mxu0 0.0
      %1051 = vmatpush1.msra.mxu0 0.0
      %1052 = vmatprep.subr.mxu0 0.0
      %1053 = vmatpush1.msra.mxu0 0.0
      %1054 = vmatprep.subr.mxu0 0.0
      %1055 = vmatpush1.msra.mxu0 0.0
      %1056 = vmatprep.subr.mxu0 0.0
      %1057 = vmatpush1.msra.mxu0 0.0
      %1058 = vmatprep.subr.mxu0 0.0
      %1059 = vmatpush1.msra.mxu0 0.0
      %1060 = vmatprep.subr.mxu0 0.0
      %1061 = vmatpush1.msra.mxu0 0.0
      %1062 = vmatprep.subr.mxu0 0.0
      %1063 = vmatpush1.msra.mxu0 0.0
      %1064 = vmatprep.subr.mxu0 0.0
      %1065 = vmatpush1.msra.mxu0 0.0
      %1066 = vmatprep.subr.mxu0 0.0
      %1067 = vmatpush1.msra.mxu0 0.0
      %1068 = vmatprep.subr.mxu0 0.0
      %1069 = vmatpush1.msra.mxu0 0.0
      %1070 = vmatprep.subr.mxu0 0.0
      %1071 = vmatpush1.msra.mxu0 0.0
      %1072 = vmatprep.subr.mxu0 0.0
      %1073 = vmatpush1.msra.mxu0 0.0
      %1074 = vmatprep.subr.mxu0 0.0
      %1075 = vmatpush1.msra.mxu0 0.0
      %1076 = vmatprep.subr.mxu0 0.0
      %1077 = vmatpush1.msra.mxu0 0.0
      %1078 = vmatprep.subr.mxu0 0.0
      %1079 = vmatpush1.msra.mxu0 0.0
      %1080 = vmatprep.subr.mxu0 0.0
      %1081 = vmatpush1.msra.mxu0 0.0
      %1082 = vmatprep.subr.mxu0 0.0
      %1083 = vmatpush1.msra.mxu0 0.0
      %1084 = vmatprep.mubr.f32.mxu0 0.0
      %1085 = vmatmul.mubr.f32.gmra.mrb[0].mxu0 %v1012
      %v1086 = vpop.f32.mrb[0].mxu0
      %v1087 = vadd.f32 0.0, %v1086
      %v1088 = vpop.f32.mrb[0].mxu0
      %1089 = vmatprep.mubr.f32.mxu0 0.0
      %1090 = vmatmul.mubr.f32.gmra.mrb[0].mxu0 %v1015
      %v1091 = vpop.f32.mrb[0].mxu0
      %v1092 = vadd.f32 0.0, %v1091
      %v1093 = vpop.f32.mrb[0].mxu0
      %1094 = vdwg.mxu0
      %v1095 = vadd.f32 %v1005, %v1087
      %v1096 = vadd.f32 %v1006, %v1092
      %v1097 = vld [vmem:[#allocation2 + $0x6] sm:$0xff]
      %v1098 = vld [vmem:[#allocation2 + $0xe] sm:$0xff]
      %s1099 = scalar_lea.vmem %s3, 24
      %v1100 = vld [vmem:[%s1099] sm:$0xf]
      %v1102 = vsel %vm543, %v1097, 0
      %v1105 = vsel %vm543, %v1098, 0
      %v1108 = vsel %vm574, %v1100, 0
      %1110 = vmatprep.subr.mxu0 0.0
      %1111 = vmatpush1.msra.mxu0 %v1108
      %1112 = vmatprep.subr.mxu0 0.0
      %1113 = vmatpush1.msra.mxu0 0.0
      %1114 = vmatprep.subr.mxu0 0.0
      %1115 = vmatpush1.msra.mxu0 0.0
      %1116 = vmatprep.subr.mxu0 0.0
      %1117 = vmatpush1.msra.mxu0 0.0
      %1118 = vmatprep.subr.mxu0 0.0
      %1119 = vmatpush1.msra.mxu0 0.0
      %1120 = vmatprep.subr.mxu0 0.0
      %1121 = vmatpush1.msra.mxu0 0.0
      %1122 = vmatprep.subr.mxu0 0.0
      %1123 = vmatpush1.msra.mxu0 0.0
      %1124 = vmatprep.subr.mxu0 0.0
      %1125 = vmatpush1.msra.mxu0 0.0
      %1126 = vmatprep.subr.mxu0 0.0
      %1127 = vmatpush1.msra.mxu0 0.0
      %1128 = vmatprep.subr.mxu0 0.0
      %1129 = vmatpush1.msra.mxu0 0.0
      %1130 = vmatprep.subr.mxu0 0.0
      %1131 = vmatpush1.msra.mxu0 0.0
      %1132 = vmatprep.subr.mxu0 0.0
      %1133 = vmatpush1.msra.mxu0 0.0
      %1134 = vmatprep.subr.mxu0 0.0
      %1135 = vmatpush1.msra.mxu0 0.0
      %1136 = vmatprep.subr.mxu0 0.0
      %1137 = vmatpush1.msra.mxu0 0.0
      %1138 = vmatprep.subr.mxu0 0.0
      %1139 = vmatpush1.msra.mxu0 0.0
      %1140 = vmatprep.subr.mxu0 0.0
      %1141 = vmatpush1.msra.mxu0 0.0
      %1142 = vmatprep.subr.mxu0 0.0
      %1143 = vmatpush1.msra.mxu0 0.0
      %1144 = vmatprep.subr.mxu0 0.0
      %1145 = vmatpush1.msra.mxu0 0.0
      %1146 = vmatprep.subr.mxu0 0.0
      %1147 = vmatpush1.msra.mxu0 0.0
      %1148 = vmatprep.subr.mxu0 0.0
      %1149 = vmatpush1.msra.mxu0 0.0
      %1150 = vmatprep.subr.mxu0 0.0
      %1151 = vmatpush1.msra.mxu0 0.0
      %1152 = vmatprep.subr.mxu0 0.0
      %1153 = vmatpush1.msra.mxu0 0.0
      %1154 = vmatprep.subr.mxu0 0.0
      %1155 = vmatpush1.msra.mxu0 0.0
      %1156 = vmatprep.subr.mxu0 0.0
      %1157 = vmatpush1.msra.mxu0 0.0
      %1158 = vmatprep.subr.mxu0 0.0
      %1159 = vmatpush1.msra.mxu0 0.0
      %1160 = vmatprep.subr.mxu0 0.0
      %1161 = vmatpush1.msra.mxu0 0.0
      %1162 = vmatprep.subr.mxu0 0.0
      %1163 = vmatpush1.msra.mxu0 0.0
      %1164 = vmatprep.subr.mxu0 0.0
      %1165 = vmatpush1.msra.mxu0 0.0
      %1166 = vmatprep.subr.mxu0 0.0
      %1167 = vmatpush1.msra.mxu0 0.0
      %1168 = vmatprep.subr.mxu0 0.0
      %1169 = vmatpush1.msra.mxu0 0.0
      %1170 = vmatprep.subr.mxu0 0.0
      %1171 = vmatpush1.msra.mxu0 0.0
      %1172 = vmatprep.subr.mxu0 0.0
      %1173 = vmatpush1.msra.mxu0 0.0
      %1174 = vmatprep.mubr.f32.mxu0 0.0
      %1175 = vmatmul.mubr.f32.gmra.mrb[0].mxu0 %v1102
      %v1176 = vpop.f32.mrb[0].mxu0
      %v1177 = vadd.f32 0.0, %v1176
      %v1178 = vpop.f32.mrb[0].mxu0
      %1179 = vmatprep.mubr.f32.mxu0 0.0
      %1180 = vmatmul.mubr.f32.gmra.mrb[0].mxu0 %v1105
      %v1181 = vpop.f32.mrb[0].mxu0
      %v1182 = vadd.f32 0.0, %v1181
      %v1183 = vpop.f32.mrb[0].mxu0
      %1184 = vdwg.mxu0
      %v1185 = vadd.f32 %v1095, %v1177
      %v1186 = vadd.f32 %v1096, %v1182
      %v1187 = vld [vmem:[#allocation2 + $0x7] sm:$0xff]
      %v1188 = vld [vmem:[#allocation2 + $0xf] sm:$0xff]
      %s1189 = scalar_lea.vmem %s3, 28
      %v1190 = vld [vmem:[%s1189] sm:$0xf]
      %v1192 = vsel %vm543, %v1187, 0
      %v1195 = vsel %vm543, %v1188, 0
      %v1198 = vsel %vm574, %v1190, 0
      %1200 = vmatprep.subr.mxu0 0.0
      %1201 = vmatpush1.msra.mxu0 %v1198
      %1202 = vmatprep.subr.mxu0 0.0
      %1203 = vmatpush1.msra.mxu0 0.0
      %1204 = vmatprep.subr.mxu0 0.0
      %1205 = vmatpush1.msra.mxu0 0.0
      %1206 = vmatprep.subr.mxu0 0.0
      %1207 = vmatpush1.msra.mxu0 0.0
      %1208 = vmatprep.subr.mxu0 0.0
      %1209 = vmatpush1.msra.mxu0 0.0
      %1210 = vmatprep.subr.mxu0 0.0
      %1211 = vmatpush1.msra.mxu0 0.0
      %1212 = vmatprep.subr.mxu0 0.0
      %1213 = vmatpush1.msra.mxu0 0.0
      %1214 = vmatprep.subr.mxu0 0.0
      %1215 = vmatpush1.msra.mxu0 0.0
      %1216 = vmatprep.subr.mxu0 0.0
      %1217 = vmatpush1.msra.mxu0 0.0
      %1218 = vmatprep.subr.mxu0 0.0
      %1219 = vmatpush1.msra.mxu0 0.0
      %1220 = vmatprep.subr.mxu0 0.0
      %1221 = vmatpush1.msra.mxu0 0.0
      %1222 = vmatprep.subr.mxu0 0.0
      %1223 = vmatpush1.msra.mxu0 0.0
      %1224 = vmatprep.subr.mxu0 0.0
      %1225 = vmatpush1.msra.mxu0 0.0
      %1226 = vmatprep.subr.mxu0 0.0
      %1227 = vmatpush1.msra.mxu0 0.0
      %1228 = vmatprep.subr.mxu0 0.0
      %1229 = vmatpush1.msra.mxu0 0.0
      %1230 = vmatprep.subr.mxu0 0.0
      %1231 = vmatpush1.msra.mxu0 0.0
      %1232 = vmatprep.subr.mxu0 0.0
      %1233 = vmatpush1.msra.mxu0 0.0
      %1234 = vmatprep.subr.mxu0 0.0
      %1235 = vmatpush1.msra.mxu0 0.0
      %1236 = vmatprep.subr.mxu0 0.0
      %1237 = vmatpush1.msra.mxu0 0.0
      %1238 = vmatprep.subr.mxu0 0.0
      %1239 = vmatpush1.msra.mxu0 0.0
      %1240 = vmatprep.subr.mxu0 0.0
      %1241 = vmatpush1.msra.mxu0 0.0
      %1242 = vmatprep.subr.mxu0 0.0
      %1243 = vmatpush1.msra.mxu0 0.0
      %1244 = vmatprep.subr.mxu0 0.0
      %1245 = vmatpush1.msra.mxu0 0.0
      %1246 = vmatprep.subr.mxu0 0.0
      %1247 = vmatpush1.msra.mxu0 0.0
      %1248 = vmatprep.subr.mxu0 0.0
      %1249 = vmatpush1.msra.mxu0 0.0
      %1250 = vmatprep.subr.mxu0 0.0
      %1251 = vmatpush1.msra.mxu0 0.0
      %1252 = vmatprep.subr.mxu0 0.0
      %1253 = vmatpush1.msra.mxu0 0.0
      %1254 = vmatprep.subr.mxu0 0.0
      %1255 = vmatpush1.msra.mxu0 0.0
      %1256 = vmatprep.subr.mxu0 0.0
      %1257 = vmatpush1.msra.mxu0 0.0
      %1258 = vmatprep.subr.mxu0 0.0
      %1259 = vmatpush1.msra.mxu0 0.0
      %1260 = vmatprep.subr.mxu0 0.0
      %1261 = vmatpush1.msra.mxu0 0.0
      %1262 = vmatprep.subr.mxu0 0.0
      %1263 = vmatpush1.msra.mxu0 0.0
      %1264 = vmatprep.mubr.f32.mxu0 0.0
      %1265 = vmatmul.mubr.f32.gmra.mrb[0].mxu0 %v1192
      %v1266 = vpop.f32.mrb[0].mxu0
      %v1267 = vadd.f32 0.0, %v1266
      %v1268 = vpop.f32.mrb[0].mxu0
      %1269 = vmatprep.mubr.f32.mxu0 0.0
      %1270 = vmatmul.mubr.f32.gmra.mrb[0].mxu0 %v1195
      %v1271 = vpop.f32.mrb[0].mxu0
      %v1272 = vadd.f32 0.0, %v1271
      %v1273 = vpop.f32.mrb[0].mxu0
      %1274 = vdwg.mxu0
      %v1275 = vadd.f32 %v1185, %v1267
      %v1276 = vadd.f32 %v1186, %v1272
      %v1277 = vld [vmem:[#allocation2 + $0x8] sm:$0xff]
      %v1278 = vld [vmem:[#allocation2 + $0x10] sm:$0xff]
      %s1279 = scalar_lea.vmem %s3, 32
      %v1280 = vld [vmem:[%s1279] sm:$0xf]
      %v1282 = vsel %vm543, %v1277, 0
      %v1285 = vsel %vm543, %v1278, 0
      %v1288 = vsel %vm574, %v1280, 0
      %1290 = vmatprep.subr.mxu0 0.0
      %1291 = vmatpush1.msra.mxu0 %v1288
      %1292 = vmatprep.subr.mxu0 0.0
      %1293 = vmatpush1.msra.mxu0 0.0
      %1294 = vmatprep.subr.mxu0 0.0
      %1295 = vmatpush1.msra.mxu0 0.0
      %1296 = vmatprep.subr.mxu0 0.0
      %1297 = vmatpush1.msra.mxu0 0.0
      %1298 = vmatprep.subr.mxu0 0.0
      %1299 = vmatpush1.msra.mxu0 0.0
      %1300 = vmatprep.subr.mxu0 0.0
      %1301 = vmatpush1.msra.mxu0 0.0
      %1302 = vmatprep.subr.mxu0 0.0
      %1303 = vmatpush1.msra.mxu0 0.0
      %1304 = vmatprep.subr.mxu0 0.0
      %1305 = vmatpush1.msra.mxu0 0.0
      %1306 = vmatprep.subr.mxu0 0.0
      %1307 = vmatpush1.msra.mxu0 0.0
      %1308 = vmatprep.subr.mxu0 0.0
      %1309 = vmatpush1.msra.mxu0 0.0
      %1310 = vmatprep.subr.mxu0 0.0
      %1311 = vmatpush1.msra.mxu0 0.0
      %1312 = vmatprep.subr.mxu0 0.0
      %1313 = vmatpush1.msra.mxu0 0.0
      %1314 = vmatprep.subr.mxu0 0.0
      %1315 = vmatpush1.msra.mxu0 0.0
      %1316 = vmatprep.subr.mxu0 0.0
      %1317 = vmatpush1.msra.mxu0 0.0
      %1318 = vmatprep.subr.mxu0 0.0
      %1319 = vmatpush1.msra.mxu0 0.0
      %1320 = vmatprep.subr.mxu0 0.0
      %1321 = vmatpush1.msra.mxu0 0.0
      %1322 = vmatprep.subr.mxu0 0.0
      %1323 = vmatpush1.msra.mxu0 0.0
      %1324 = vmatprep.subr.mxu0 0.0
      %1325 = vmatpush1.msra.mxu0 0.0
      %1326 = vmatprep.subr.mxu0 0.0
      %1327 = vmatpush1.msra.mxu0 0.0
      %1328 = vmatprep.subr.mxu0 0.0
      %1329 = vmatpush1.msra.mxu0 0.0
      %1330 = vmatprep.subr.mxu0 0.0
      %1331 = vmatpush1.msra.mxu0 0.0
      %1332 = vmatprep.subr.mxu0 0.0
      %1333 = vmatpush1.msra.mxu0 0.0
      %1334 = vmatprep.subr.mxu0 0.0
      %1335 = vmatpush1.msra.mxu0 0.0
      %1336 = vmatprep.subr.mxu0 0.0
      %1337 = vmatpush1.msra.mxu0 0.0
      %1338 = vmatprep.subr.mxu0 0.0
      %1339 = vmatpush1.msra.mxu0 0.0
      %1340 = vmatprep.subr.mxu0 0.0
      %1341 = vmatpush1.msra.mxu0 0.0
      %1342 = vmatprep.subr.mxu0 0.0
      %1343 = vmatpush1.msra.mxu0 0.0
      %1344 = vmatprep.subr.mxu0 0.0
      %1345 = vmatpush1.msra.mxu0 0.0
      %1346 = vmatprep.subr.mxu0 0.0
      %1347 = vmatpush1.msra.mxu0 0.0
      %1348 = vmatprep.subr.mxu0 0.0
      %1349 = vmatpush1.msra.mxu0 0.0
      %1350 = vmatprep.subr.mxu0 0.0
      %1351 = vmatpush1.msra.mxu0 0.0
      %1352 = vmatprep.subr.mxu0 0.0
      %1353 = vmatpush1.msra.mxu0 0.0
      %1354 = vmatprep.mubr.f32.mxu0 0.0
      %1355 = vmatmul.mubr.f32.gmra.mrb[0].mxu0 %v1282
      %v1356 = vpop.f32.mrb[0].mxu0
      %v1357 = vadd.f32 0.0, %v1356
      %v1358 = vpop.f32.mrb[0].mxu0
      %1359 = vmatprep.mubr.f32.mxu0 0.0
      %1360 = vmatmul.mubr.f32.gmra.mrb[0].mxu0 %v1285
      %v1361 = vpop.f32.mrb[0].mxu0
      %v1362 = vadd.f32 0.0, %v1361
      %v1363 = vpop.f32.mrb[0].mxu0
      %1364 = vdwg.mxu0
      %v1365 = vadd.f32 %v1275, %v1357
      %v1366 = vadd.f32 %v1276, %v1362
      %v1367 = vld [vmem:[#allocation2 + $0x9] sm:$0xff]
      %v1368 = vld [vmem:[#allocation2 + $0x11] sm:$0xff]
      %s1369 = scalar_lea.vmem %s3, 36
      %v1370 = vld [vmem:[%s1369] sm:$0xf]
      %v1372 = vsel %vm543, %v1367, 0
      %v1375 = vsel %vm543, %v1368, 0
      %v1378 = vsel %vm574, %v1370, 0
      %1380 = vmatprep.subr.mxu0 0.0
      %1381 = vmatpush1.msra.mxu0 %v1378
      %1382 = vmatprep.subr.mxu0 0.0
      %1383 = vmatpush1.msra.mxu0 0.0
      %1384 = vmatprep.subr.mxu0 0.0
      %1385 = vmatpush1.msra.mxu0 0.0
      %1386 = vmatprep.subr.mxu0 0.0
      %1387 = vmatpush1.msra.mxu0 0.0
      %1388 = vmatprep.subr.mxu0 0.0
      %1389 = vmatpush1.msra.mxu0 0.0
      %1390 = vmatprep.subr.mxu0 0.0
      %1391 = vmatpush1.msra.mxu0 0.0
      %1392 = vmatprep.subr.mxu0 0.0
      %1393 = vmatpush1.msra.mxu0 0.0
      %1394 = vmatprep.subr.mxu0 0.0
      %1395 = vmatpush1.msra.mxu0 0.0
      %1396 = vmatprep.subr.mxu0 0.0
      %1397 = vmatpush1.msra.mxu0 0.0
      %1398 = vmatprep.subr.mxu0 0.0
      %1399 = vmatpush1.msra.mxu0 0.0
      %1400 = vmatprep.subr.mxu0 0.0
      %1401 = vmatpush1.msra.mxu0 0.0
      %1402 = vmatprep.subr.mxu0 0.0
      %1403 = vmatpush1.msra.mxu0 0.0
      %1404 = vmatprep.subr.mxu0 0.0
      %1405 = vmatpush1.msra.mxu0 0.0
      %1406 = vmatprep.subr.mxu0 0.0
      %1407 = vmatpush1.msra.mxu0 0.0
      %1408 = vmatprep.subr.mxu0 0.0
      %1409 = vmatpush1.msra.mxu0 0.0
      %1410 = vmatprep.subr.mxu0 0.0
      %1411 = vmatpush1.msra.mxu0 0.0
      %1412 = vmatprep.subr.mxu0 0.0
      %1413 = vmatpush1.msra.mxu0 0.0
      %1414 = vmatprep.subr.mxu0 0.0
      %1415 = vmatpush1.msra.mxu0 0.0
      %1416 = vmatprep.subr.mxu0 0.0
      %1417 = vmatpush1.msra.mxu0 0.0
      %1418 = vmatprep.subr.mxu0 0.0
      %1419 = vmatpush1.msra.mxu0 0.0
      %1420 = vmatprep.subr.mxu0 0.0
      %1421 = vmatpush1.msra.mxu0 0.0
      %1422 = vmatprep.subr.mxu0 0.0
      %1423 = vmatpush1.msra.mxu0 0.0
      %1424 = vmatprep.subr.mxu0 0.0
      %1425 = vmatpush1.msra.mxu0 0.0
      %1426 = vmatprep.subr.mxu0 0.0
      %1427 = vmatpush1.msra.mxu0 0.0
      %1428 = vmatprep.subr.mxu0 0.0
      %1429 = vmatpush1.msra.mxu0 0.0
      %1430 = vmatprep.subr.mxu0 0.0
      %1431 = vmatpush1.msra.mxu0 0.0
      %1432 = vmatprep.subr.mxu0 0.0
      %1433 = vmatpush1.msra.mxu0 0.0
      %1434 = vmatprep.subr.mxu0 0.0
      %1435 = vmatpush1.msra.mxu0 0.0
      %1436 = vmatprep.subr.mxu0 0.0
      %1437 = vmatpush1.msra.mxu0 0.0
      %1438 = vmatprep.subr.mxu0 0.0
      %1439 = vmatpush1.msra.mxu0 0.0
      %1440 = vmatprep.subr.mxu0 0.0
      %1441 = vmatpush1.msra.mxu0 0.0
      %1442 = vmatprep.subr.mxu0 0.0
      %1443 = vmatpush1.msra.mxu0 0.0
      %1444 = vmatprep.mubr.f32.mxu0 0.0
      %1445 = vmatmul.mubr.f32.gmra.mrb[0].mxu0 %v1372
      %v1446 = vpop.f32.mrb[0].mxu0
      %v1447 = vadd.f32 0.0, %v1446
      %v1448 = vpop.f32.mrb[0].mxu0
      %1449 = vmatprep.mubr.f32.mxu0 0.0
      %1450 = vmatmul.mubr.f32.gmra.mrb[0].mxu0 %v1375
      %v1451 = vpop.f32.mrb[0].mxu0
      %v1452 = vadd.f32 0.0, %v1451
      %v1453 = vpop.f32.mrb[0].mxu0
      %1454 = vdwg.mxu0
      %v1455 = vadd.f32 %v1365, %v1447
      %v1456 = vadd.f32 %v1366, %v1452
      %v1457 = vld [vmem:[#allocation2 + $0xa] sm:$0xff]
      %v1458 = vld [vmem:[#allocation2 + $0x12] sm:$0xff]
      %s1459 = scalar_lea.vmem %s3, 40
      %v1460 = vld [vmem:[%s1459] sm:$0xf]
      %v1462 = vsel %vm543, %v1457, 0
      %v1465 = vsel %vm543, %v1458, 0
      %v1468 = vsel %vm574, %v1460, 0
      %1470 = vmatprep.subr.mxu0 0.0
      %1471 = vmatpush1.msra.mxu0 %v1468
      %1472 = vmatprep.subr.mxu0 0.0
      %1473 = vmatpush1.msra.mxu0 0.0
      %1474 = vmatprep.subr.mxu0 0.0
      %1475 = vmatpush1.msra.mxu0 0.0
      %1476 = vmatprep.subr.mxu0 0.0
      %1477 = vmatpush1.msra.mxu0 0.0
      %1478 = vmatprep.subr.mxu0 0.0
      %1479 = vmatpush1.msra.mxu0 0.0
      %1480 = vmatprep.subr.mxu0 0.0
      %1481 = vmatpush1.msra.mxu0 0.0
      %1482 = vmatprep.subr.mxu0 0.0
      %1483 = vmatpush1.msra.mxu0 0.0
      %1484 = vmatprep.subr.mxu0 0.0
      %1485 = vmatpush1.msra.mxu0 0.0
      %1486 = vmatprep.subr.mxu0 0.0
      %1487 = vmatpush1.msra.mxu0 0.0
      %1488 = vmatprep.subr.mxu0 0.0
      %1489 = vmatpush1.msra.mxu0 0.0
      %1490 = vmatprep.subr.mxu0 0.0
      %1491 = vmatpush1.msra.mxu0 0.0
      %1492 = vmatprep.subr.mxu0 0.0
      %1493 = vmatpush1.msra.mxu0 0.0
      %1494 = vmatprep.subr.mxu0 0.0
      %1495 = vmatpush1.msra.mxu0 0.0
      %1496 = vmatprep.subr.mxu0 0.0
      %1497 = vmatpush1.msra.mxu0 0.0
      %1498 = vmatprep.subr.mxu0 0.0
      %1499 = vmatpush1.msra.mxu0 0.0
      %1500 = vmatprep.subr.mxu0 0.0
      %1501 = vmatpush1.msra.mxu0 0.0
      %1502 = vmatprep.subr.mxu0 0.0
      %1503 = vmatpush1.msra.mxu0 0.0
      %1504 = vmatprep.subr.mxu0 0.0
      %1505 = vmatpush1.msra.mxu0 0.0
      %1506 = vmatprep.subr.mxu0 0.0
      %1507 = vmatpush1.msra.mxu0 0.0
      %1508 = vmatprep.subr.mxu0 0.0
      %1509 = vmatpush1.msra.mxu0 0.0
      %1510 = vmatprep.subr.mxu0 0.0
      %1511 = vmatpush1.msra.mxu0 0.0
      %1512 = vmatprep.subr.mxu0 0.0
      %1513 = vmatpush1.msra.mxu0 0.0
      %1514 = vmatprep.subr.mxu0 0.0
      %1515 = vmatpush1.msra.mxu0 0.0
      %1516 = vmatprep.subr.mxu0 0.0
      %1517 = vmatpush1.msra.mxu0 0.0
      %1518 = vmatprep.subr.mxu0 0.0
      %1519 = vmatpush1.msra.mxu0 0.0
      %1520 = vmatprep.subr.mxu0 0.0
      %1521 = vmatpush1.msra.mxu0 0.0
      %1522 = vmatprep.subr.mxu0 0.0
      %1523 = vmatpush1.msra.mxu0 0.0
      %1524 = vmatprep.subr.mxu0 0.0
      %1525 = vmatpush1.msra.mxu0 0.0
      %1526 = vmatprep.subr.mxu0 0.0
      %1527 = vmatpush1.msra.mxu0 0.0
      %1528 = vmatprep.subr.mxu0 0.0
      %1529 = vmatpush1.msra.mxu0 0.0
      %1530 = vmatprep.subr.mxu0 0.0
      %1531 = vmatpush1.msra.mxu0 0.0
      %1532 = vmatprep.subr.mxu0 0.0
      %1533 = vmatpush1.msra.mxu0 0.0
      %1534 = vmatprep.mubr.f32.mxu0 0.0
      %1535 = vmatmul.mubr.f32.gmra.mrb[0].mxu0 %v1462
      %v1536 = vpop.f32.mrb[0].mxu0
      %v1537 = vadd.f32 0.0, %v1536
      %v1538 = vpop.f32.mrb[0].mxu0
      %1539 = vmatprep.mubr.f32.mxu0 0.0
      %1540 = vmatmul.mubr.f32.gmra.mrb[0].mxu0 %v1465
      %v1541 = vpop.f32.mrb[0].mxu0
      %v1542 = vadd.f32 0.0, %v1541
      %v1543 = vpop.f32.mrb[0].mxu0
      %1544 = vdwg.mxu0
      %v1545 = vadd.f32 %v1455, %v1537
      %v1546 = vadd.f32 %v1456, %v1542
      %v1547 = vld [vmem:[%s4] sm:$0x1]
      %v1549 = vlaneseq
      %v1550 = vshrl.u32 %v1549, 7
      %v1551 = vsub.s32 0, %v1550
      %v1552 = vrot.slane %v1547, %v1551
      %v1554 = vmul.f32 %v1545, %v1552
      %v1555 = vmul.f32 %v1546, %v1552
      %v1556 = vld [vmem:[%s5] sm:$0x1]
      %v1558 = vlaneseq
      %v1559 = vshrl.u32 %v1558, 7
      %v1560 = vsub.s32 0, %v1559
      %v1561 = vrot.slane %v1556, %v1560
      %v1563 = vadd.f32 %v1554, %v1561
      %v1564 = vadd.f32 %v1555, %v1561
      %v1565 = vmax.f32 %v1563, 0.0
      %v1566 = vmax.f32 %v1564, 0.0
      %vm1567 = vcmask 64512
      %1568 = vst.msk [vmem:[%s529] sm:$0xff] %vm1567, %v1565
      %1569 = vst.msk [vmem:[%s529 + $0x8] sm:$0xff] %vm1567, %v1566
      %v1570 = vld [vmem:[%s503] sm:$0xff]
      %v1571 = vld [vmem:[%s503 + $0x8] sm:$0xff]
      %v1572 = vld [vmem:[%s6] sm:$0xf]
      %v1574 = vsel %vm543, %v1570, 0
      %v1577 = vsel %vm543, %v1571, 0
      %v1580 = vsel %vm574, %v1572, 0
      %1582 = vmatprep.subr.mxu0 0.0
      %1583 = vmatpush1.msra.mxu0 %v1580
      %1584 = vmatprep.subr.mxu0 0.0
      %1585 = vmatpush1.msra.mxu0 0.0
      %1586 = vmatprep.subr.mxu0 0.0
      %1587 = vmatpush1.msra.mxu0 0.0
      %1588 = vmatprep.subr.mxu0 0.0
      %1589 = vmatpush1.msra.mxu0 0.0
      %1590 = vmatprep.subr.mxu0 0.0
      %1591 = vmatpush1.msra.mxu0 0.0
      %1592 = vmatprep.subr.mxu0 0.0
      %1593 = vmatpush1.msra.mxu0 0.0
      %1594 = vmatprep.subr.mxu0 0.0
      %1595 = vmatpush1.msra.mxu0 0.0
      %1596 = vmatprep.subr.mxu0 0.0
      %1597 = vmatpush1.msra.mxu0 0.0
      %1598 = vmatprep.subr.mxu0 0.0
      %1599 = vmatpush1.msra.mxu0 0.0
      %1600 = vmatprep.subr.mxu0 0.0
      %1601 = vmatpush1.msra.mxu0 0.0
      %1602 = vmatprep.subr.mxu0 0.0
      %1603 = vmatpush1.msra.mxu0 0.0
      %1604 = vmatprep.subr.mxu0 0.0
      %1605 = vmatpush1.msra.mxu0 0.0
      %1606 = vmatprep.subr.mxu0 0.0
      %1607 = vmatpush1.msra.mxu0 0.0
      %1608 = vmatprep.subr.mxu0 0.0
      %1609 = vmatpush1.msra.mxu0 0.0
      %1610 = vmatprep.subr.mxu0 0.0
      %1611 = vmatpush1.msra.mxu0 0.0
      %1612 = vmatprep.subr.mxu0 0.0
      %1613 = vmatpush1.msra.mxu0 0.0
      %1614 = vmatprep.subr.mxu0 0.0
      %1615 = vmatpush1.msra.mxu0 0.0
      %1616 = vmatprep.subr.mxu0 0.0
      %1617 = vmatpush1.msra.mxu0 0.0
      %1618 = vmatprep.subr.mxu0 0.0
      %1619 = vmatpush1.msra.mxu0 0.0
      %1620 = vmatprep.subr.mxu0 0.0
      %1621 = vmatpush1.msra.mxu0 0.0
      %1622 = vmatprep.subr.mxu0 0.0
      %1623 = vmatpush1.msra.mxu0 0.0
      %1624 = vmatprep.subr.mxu0 0.0
      %1625 = vmatpush1.msra.mxu0 0.0
      %1626 = vmatprep.subr.mxu0 0.0
      %1627 = vmatpush1.msra.mxu0 0.0
      %1628 = vmatprep.subr.mxu0 0.0
      %1629 = vmatpush1.msra.mxu0 0.0
      %1630 = vmatprep.subr.mxu0 0.0
      %1631 = vmatpush1.msra.mxu0 0.0
      %1632 = vmatprep.subr.mxu0 0.0
      %1633 = vmatpush1.msra.mxu0 0.0
      %1634 = vmatprep.subr.mxu0 0.0
      %1635 = vmatpush1.msra.mxu0 0.0
      %1636 = vmatprep.subr.mxu0 0.0
      %1637 = vmatpush1.msra.mxu0 0.0
      %1638 = vmatprep.subr.mxu0 0.0
      %1639 = vmatpush1.msra.mxu0 0.0
      %1640 = vmatprep.subr.mxu0 0.0
      %1641 = vmatpush1.msra.mxu0 0.0
      %1642 = vmatprep.subr.mxu0 0.0
      %1643 = vmatpush1.msra.mxu0 0.0
      %1644 = vmatprep.subr.mxu0 0.0
      %1645 = vmatpush1.msra.mxu0 0.0
      %1646 = vmatprep.mubr.f32.mxu0 0.0
      %1647 = vmatmul.mubr.f32.gmra.mrb[0].mxu0 %v1574
      %v1648 = vpop.f32.mrb[0].mxu0
      %v1649 = vadd.f32 0.0, %v1648
      %v1650 = vpop.f32.mrb[0].mxu0
      %1651 = vmatprep.mubr.f32.mxu0 0.0
      %1652 = vmatmul.mubr.f32.gmra.mrb[0].mxu0 %v1577
      %v1653 = vpop.f32.mrb[0].mxu0
      %v1654 = vadd.f32 0.0, %v1653
      %v1655 = vpop.f32.mrb[0].mxu0
      %1656 = vdwg.mxu0
      %v1657 = vld [vmem:[%s7] sm:$0x1]
      %v1659 = vlaneseq
      %v1660 = vshrl.u32 %v1659, 7
      %v1661 = vsub.s32 0, %v1660
      %v1662 = vrot.slane %v1657, %v1661
      %v1664 = vmul.f32 %v1649, %v1662
      %v1665 = vmul.f32 %v1654, %v1662
      %v1666 = vld [vmem:[%s8] sm:$0x1]
      %v1668 = vlaneseq
      %v1669 = vshrl.u32 %v1668, 7
      %v1670 = vsub.s32 0, %v1669
      %v1671 = vrot.slane %v1666, %v1670
      %v1673 = vadd.f32 %v1664, %v1671
      %v1674 = vadd.f32 %v1665, %v1671
      %1675 = vst.msk [vmem:[%s539] sm:$0xff] %vm1567, %v1673
      %1676 = vst.msk [vmem:[%s539 + $0x8] sm:$0xff] %vm1567, %v1674
      %s1677 = smul.u32 2, %s27
      %p1678 = scmp.lt.s32.totalorder %s26, 1
      %s1679 = scalar_select %p1678, %s26, 1
      %p1680 = scmp.lt.s32.totalorder %s1677, 3
      %s1681 = scalar_select %p1680, %s1677, 3
      %s1682 = smul.addr %s1679, 4
      %s1683 = sadd.s32 %s1681, %s1682
      %s1684 = smul.addr %s1683, 8
      %s1685 = scalar_lea.vmem %s9, %s1684
      %s1686 = smul.u32 2, %s27
      %p1687 = scmp.lt.s32.totalorder %s26, 1
      %s1688 = scalar_select %p1687, %s26, 1
      %p1689 = scmp.lt.s32.totalorder %s1686, 3
      %s1690 = scalar_select %p1689, %s1686, 3
      %s1691 = smul.addr %s1688, 4
      %s1692 = sadd.s32 %s1690, %s1691
      %s1693 = smul.addr %s1692, 8
      %s1694 = scalar_lea.vmem %s10, %s1693
      // Predicated region
      $region57: #{tpu_custom_call.1} parent=55 // pred_check
        %p1695 = pneg %p280
      $region58: #{tpu_custom_call.1} parent=55 // pred_check_branch
        %1697 = sbr.rel (%p1695) target = $region60
      $region59: #{tpu_custom_call.1} parent=55 // pred_region
        %s1698 = smul.u32 2, %s27
      $region60: #{tpu_custom_call.1} parent=55 // pred_fallthru
        _
      // Predicated region
      $region61: #{tpu_custom_call.1} parent=55 // pred_check
        %p1699 = pneg %p308
      $region62: #{tpu_custom_call.1} parent=55 // pred_check_branch
        %1701 = sbr.rel (%p1699) target = $region64
      $region63: #{tpu_custom_call.1} parent=55 // pred_region
        %s1702 = smul.u32 2, %s27
      $region64: #{tpu_custom_call.1} parent=55 // pred_fallthru
        _
    $region56: #{tpu_custom_call.1} parent=5 // pred_fallthru
      _
    %p1703 = scmp.le.s32.totalorder 2, %s17
    // Predicated region
    $region65: #{tpu_custom_call.1} parent=5 // pred_check
      %p1704 = pneg %p1703
    $region66: #{tpu_custom_call.1} parent=5 // pred_check_branch
      %1706 = sbr.rel (%p1704) target = $region68
    $region67: #{tpu_custom_call.1} parent=5 // pred_region
      %s1707 = ssub.s32 %s17, 2
      // Predicated region
      $region69: #{tpu_custom_call.1} parent=67 // pred_check
        %p1708 = pneg %p286
      $region70: #{tpu_custom_call.1} parent=67 // pred_check_branch
        %1710 = sbr.rel (%p1708) target = $region72
      $region71: #{tpu_custom_call.1} parent=67 // pred_region
        %s1711 = smul.u32 2, %s29
        %p1712 = scmp.lt.s32.totalorder %s28, 1
        %s1713 = scalar_select %p1712, %s28, 1
        %p1714 = scmp.lt.s32.totalorder %s1711, 3
        %s1715 = scalar_select %p1714, %s1711, 3
        %s1716 = smul.addr %s1713, 4
        %s1717 = sadd.s32 %s1715, %s1716
        %s1718 = smul.addr %s1717, 8
        %s1719 = scalar_lea.vmem %s9, %s1718
      $region72: #{tpu_custom_call.1} parent=67 // pred_fallthru
        _
      // Predicated region
      $region73: #{tpu_custom_call.1} parent=67 // pred_check
        %p1720 = pneg %p314
      $region74: #{tpu_custom_call.1} parent=67 // pred_check_branch
        %1722 = sbr.rel (%p1720) target = $region76
      $region75: #{tpu_custom_call.1} parent=67 // pred_region
        %s1723 = smul.u32 2, %s29
        %p1724 = scmp.lt.s32.totalorder %s28, 1
        %s1725 = scalar_select %p1724, %s28, 1
        %p1726 = scmp.lt.s32.totalorder %s1723, 3
        %s1727 = scalar_select %p1726, %s1723, 3
        %s1728 = smul.addr %s1725, 4
        %s1729 = sadd.s32 %s1727, %s1728
        %s1730 = smul.addr %s1729, 8
        %s1731 = scalar_lea.vmem %s10, %s1730
      $region76: #{tpu_custom_call.1} parent=67 // pred_fallthru
        _
    $region68: #{tpu_custom_call.1} parent=5 // pred_fallthru
      _
  $region6: #{tpu_custom_call.1} parent=0 // loop_footer
    %s21 = sadd.s32 1, %s17
  $region7: #{tpu_custom_call.1} parent=0 // loop_footer_branch
    %16 = sbr.rel target = $region3
  $region8: #{tpu_custom_call.1} parent=0 // loop_exit
    _

</llo_original>
